<compile_context>
chip_gen: v7x
topology: tpu7x:2x2x1
jax: 0.10.0
libtpu: 0.0.40
codegen_flags: <defaults>
</compile_context>

<pallas_src>
import jax
import jax.numpy as jnp
from jax.experimental import pallas as pl
from jax.experimental.pallas import tpu as pltpu

N_EMBD = 256          # matches the module constant n_embd
HIDDEN = 4 * N_EMBD   # 1024


def _round_up(a, b):
    return ((a + b - 1) // b) * b


def _ffwd_kernel(x_ref, w1_ref, b1_ref, w2_ref, b2_ref, o_ref):
    # x_ref : (tm, C)    bf16   (one row-tile of the flattened input)
    # w1_ref: (C, 4C)    bf16   (resident)
    # b1_ref: (1, 4C)    f32    (resident)
    # w2_ref: (4C, C)    bf16   (resident)
    # b2_ref: (1, C)     f32    (resident)
    # o_ref : (tm, C)    x.dtype
    h = jnp.dot(x_ref[...], w1_ref[...],
                preferred_element_type=jnp.float32)          # (tm, 4C) f32 acc
    h = jnp.maximum(h + b1_ref[...], 0.0)                    # bias + ReLU (VPU, f32)
    h = h.astype(w2_ref.dtype)                               # bf16 operands for MXU
    y = jnp.dot(h, w2_ref[...],
                preferred_element_type=jnp.float32)          # (tm, C) f32 acc
    y = y + b2_ref[...]
    o_ref[...] = y.astype(o_ref.dtype)
    # Dropout(p=0) is an identity; no RNG work needed.


def feedforward_forward(x, w1, b1, w2, b2, *, block_rows=256):
    """Pallas implementation of FeedFoward.forward.

    x : (B, T, C)
    w1: (C, 4C)   (PyTorch nn.Linear weight transposed)   b1: (4C,)
    w2: (4C, C)   (PyTorch nn.Linear weight transposed)   b2: (C,)
    """
    B, T, C = x.shape
    Hid = w1.shape[1]
    M = B * T

    # Cast once in the wrapper: bf16 MXU operands, biases stay f32.
    xf = x.reshape(M, C).astype(jnp.bfloat16)
    w1b = w1.astype(jnp.bfloat16)
    w2b = w2.astype(jnp.bfloat16)
    b1f = b1.reshape(1, Hid).astype(jnp.float32)
    b2f = b2.reshape(1, C).astype(jnp.float32)

    # Row tile: up to 256 rows (fills 128/256-wide MXU tiles); pad M to a multiple.
    tm = min(block_rows, _round_up(M, 16))
    M_pad = _round_up(M, tm)
    if M_pad != M:
        xf = jnp.pad(xf, ((0, M_pad - M), (0, 0)))

    grid = (M_pad // tm,)

    cost = pl.CostEstimate(
        flops=2 * M_pad * C * Hid + 2 * M_pad * Hid * C,
        transcendentals=0,
        bytes_accessed=(xf.size * 2 + w1b.size * 2 + w2b.size * 2
                        + b1f.size * 4 + b2f.size * 4
                        + M_pad * C * jnp.dtype(x.dtype).itemsize),
    )

    out = pl.pallas_call(
        _ffwd_kernel,
        out_shape=jax.ShapeDtypeStruct((M_pad, C), x.dtype),
        grid_spec=pltpu.PrefetchScalarGridSpec(
            num_scalar_prefetch=0,
            grid=grid,
            in_specs=[
                pl.BlockSpec((tm, C), lambda i: (i, 0)),      # x row tile
                pl.BlockSpec((C, Hid), lambda i: (0, 0)),     # W1 (resident)
                pl.BlockSpec((1, Hid), lambda i: (0, 0)),     # b1 (resident)
                pl.BlockSpec((Hid, C), lambda i: (0, 0)),     # W2 (resident)
                pl.BlockSpec((1, C), lambda i: (0, 0)),       # b2 (resident)
            ],
            out_specs=pl.BlockSpec((tm, C), lambda i: (i, 0)),
        ),
        compiler_params=pltpu.CompilerParams(
            dimension_semantics=("parallel",),
            vmem_limit_bytes=32 * 1024 * 1024,
        ),
        cost_estimate=cost,
    )(xf, w1b, b1f, w2b, b2f)

    return out[:M].reshape(B, T, C)


def feedforward_reference(x, w1, b1, w2, b2):
    """Pure-JAX reference using the same bf16-operand / f32-accumulate math."""
    xf = x.astype(jnp.bfloat16)
    h = jnp.dot(xf, w1.astype(jnp.bfloat16), preferred_element_type=jnp.float32)
    h = jnp.maximum(h + b1.astype(jnp.float32), 0.0)
    y = jnp.dot(h.astype(jnp.bfloat16), w2.astype(jnp.bfloat16),
                preferred_element_type=jnp.float32)
    return (y + b2.astype(jnp.float32)).astype(x.dtype)


if __name__ == "__main__":
    key = jax.random.PRNGKey(0)
    B, T, C = 2, 8, N_EMBD
    Hid = HIDDEN

    k0, k1, k2, k3, k4 = jax.random.split(key, 5)
    x = jax.random.normal(k0, (B, T, C), dtype=jnp.float32)

    # PyTorch nn.Linear init: U(-1/sqrt(fan_in), 1/sqrt(fan_in)); weights stored
    # pre-transposed as (in, out) so the kernel computes x @ W.
    bound1 = 1.0 / (C ** 0.5)
    bound2 = 1.0 / (Hid ** 0.5)
    w1 = jax.random.uniform(k1, (C, Hid), jnp.float32, -bound1, bound1)
    b1 = jax.random.uniform(k2, (Hid,), jnp.float32, -bound1, bound1)
    w2 = jax.random.uniform(k3, (Hid, C), jnp.float32, -bound2, bound2)
    b2 = jax.random.uniform(k4, (C,), jnp.float32, -bound2, bound2)

    out = feedforward_forward(x, w1, b1, w2, b2)
    jax.block_until_ready(out)

    ref = feedforward_reference(x, w1, b1, w2, b2)
    assert out.shape == (B, T, C)
    assert jnp.allclose(out, ref, atol=5e-3, rtol=5e-3), \
        float(jnp.max(jnp.abs(out - ref)))
    print("KERNEL_OK")
</pallas_src>

<mosaic_0001>
module attributes {stable_mosaic.version = 11 : i64} {
  func.func @_ffwd_kernel(%arg0: i32, %arg1: memref<16x256xbf16, #tpu.memory_space<vmem>>, %arg2: memref<256x1024xbf16, #tpu.memory_space<vmem>>, %arg3: memref<1x1024xf32, #tpu.memory_space<vmem>>, %arg4: memref<1024x256xbf16, #tpu.memory_space<vmem>>, %arg5: memref<1x256xf32, #tpu.memory_space<vmem>>, %arg6: memref<16x256xf32, #tpu.memory_space<vmem>>) attributes {dimension_semantics = [#tpu.dimension_semantics<parallel>], iteration_bounds = array<i64: 1>, scalar_prefetch = 0 : i64, scratch_operands = 0 : i64, tpu.core_type = #tpu.core_type<tc>, window_params = [{transform_indices = @transform_0, window_bounds = array<i64: 16, 256>}, {pipeline_mode = #tpu.pipeline_mode<synchronous>, transform_indices = @transform_1, window_bounds = array<i64: 256, 1024>}, {pipeline_mode = #tpu.pipeline_mode<synchronous>, transform_indices = @transform_2, window_bounds = array<i64: 1, 1024>}, {pipeline_mode = #tpu.pipeline_mode<synchronous>, transform_indices = @transform_3, window_bounds = array<i64: 1024, 256>}, {pipeline_mode = #tpu.pipeline_mode<synchronous>, transform_indices = @transform_4, window_bounds = array<i64: 1, 256>}, {transform_indices = @transform_5, window_bounds = array<i64: 16, 256>}]} {
    %c0 = arith.constant 0 : index
    %c0_0 = arith.constant 0 : index
    %0 = vector.load %arg1[%c0, %c0_0] : memref<16x256xbf16, #tpu.memory_space<vmem>>, vector<16x256xbf16>
    %c0_1 = arith.constant 0 : index
    %c0_2 = arith.constant 0 : index
    %1 = vector.load %arg2[%c0_1, %c0_2] : memref<256x1024xbf16, #tpu.memory_space<vmem>>, vector<256x1024xbf16>
    %cst = arith.constant dense<0.000000e+00> : vector<16x1024xf32>
    %2 = tpu.matmul %0, %1, %cst {dimension_numbers = #tpu.dot_dimension_numbers<[1], [0], [0], [1], [0, 0, 1, 1], [], []>} : vector<16x256xbf16>, vector<256x1024xbf16>, vector<16x1024xf32> -> vector<16x1024xf32>
    %c0_3 = arith.constant 0 : index
    %c0_4 = arith.constant 0 : index
    %3 = vector.load %arg3[%c0_3, %c0_4] : memref<1x1024xf32, #tpu.memory_space<vmem>>, vector<1x1024xf32>
    %4 = vector.broadcast %3 : vector<1x1024xf32> to vector<16x1024xf32>
    %5 = arith.addf %2, %4 : vector<16x1024xf32>
    %cst_5 = arith.constant 0.000000e+00 : f32
    %6 = vector.broadcast %cst_5 : f32 to vector<16x1024xf32>
    %7 = arith.maximumf %5, %6 : vector<16x1024xf32>
    %8 = arith.truncf %7 : vector<16x1024xf32> to vector<16x1024xbf16>
    %c0_6 = arith.constant 0 : index
    %c0_7 = arith.constant 0 : index
    %9 = vector.load %arg4[%c0_6, %c0_7] : memref<1024x256xbf16, #tpu.memory_space<vmem>>, vector<1024x256xbf16>
    %cst_8 = arith.constant dense<0.000000e+00> : vector<16x256xf32>
    %10 = tpu.matmul %8, %9, %cst_8 {dimension_numbers = #tpu.dot_dimension_numbers<[1], [0], [0], [1], [0, 0, 1, 1], [], []>} : vector<16x1024xbf16>, vector<1024x256xbf16>, vector<16x256xf32> -> vector<16x256xf32>
    %c0_9 = arith.constant 0 : index
    %c0_10 = arith.constant 0 : index
    %11 = vector.load %arg5[%c0_9, %c0_10] : memref<1x256xf32, #tpu.memory_space<vmem>>, vector<1x256xf32>
    %12 = vector.broadcast %11 : vector<1x256xf32> to vector<16x256xf32>
    %13 = arith.addf %10, %12 : vector<16x256xf32>
    %c0_11 = arith.constant 0 : index
    %c0_12 = arith.constant 0 : index
    %14 = vector.load %arg6[%c0_11, %c0_12] : memref<16x256xf32, #tpu.memory_space<vmem>>, vector<16x256xf32>
    tpu.vector_store %arg6[%c0_11, %c0_12], %13 {strides = array<i32>} : memref<16x256xf32, #tpu.memory_space<vmem>>, vector<16x256xf32>,
    return
  }
  func.func @transform_0(%arg0: i32) -> (i32, i32) {
    %c0_i32 = arith.constant 0 : i32
    %c0_i32_0 = arith.constant 0 : i32
    return %arg0, %c0_i32 : i32, i32
  }
  func.func @transform_1(%arg0: i32) -> (i32, i32) {
    %c0_i32 = arith.constant 0 : i32
    %c0_i32_0 = arith.constant 0 : i32
    %c0_i32_1 = arith.constant 0 : i32
    return %c0_i32, %c0_i32_0 : i32, i32
  }
  func.func @transform_2(%arg0: i32) -> (i32, i32) {
    %c0_i32 = arith.constant 0 : i32
    %c0_i32_0 = arith.constant 0 : i32
    %c0_i32_1 = arith.constant 0 : i32
    return %c0_i32, %c0_i32_0 : i32, i32
  }
  func.func @transform_3(%arg0: i32) -> (i32, i32) {
    %c0_i32 = arith.constant 0 : i32
    %c0_i32_0 = arith.constant 0 : i32
    %c0_i32_1 = arith.constant 0 : i32
    return %c0_i32, %c0_i32_0 : i32, i32
  }
  func.func @transform_4(%arg0: i32) -> (i32, i32) {
    %c0_i32 = arith.constant 0 : i32
    %c0_i32_0 = arith.constant 0 : i32
    %c0_i32_1 = arith.constant 0 : i32
    return %c0_i32, %c0_i32_0 : i32, i32
  }
  func.func @transform_5(%arg0: i32) -> (i32, i32) {
    %c0_i32 = arith.constant 0 : i32
    %c0_i32_0 = arith.constant 0 : i32
    return %arg0, %c0_i32 : i32, i32
  }
}

</mosaic_0001>

<llo_original>
// kernel: tpu_custom_call.1
$region0: #{tpu_custom_call.1}
  #allocation0 [shape = 'u32[]', space=smem, size = 0x4, offset = 0x4, fixed_abs, tag = 'smem constant byte address 0x4 - core index']
  #allocation1 [shape = 'u32[144,128]{1,0:T(1,128)}', space=vmem, size = 0x12000, scoped, tag = 'internal scratch']
  %s0 = inlined_call_operand.hbm [shape: bf16[16,256], index: 0, kind: input, shape index: {}]
  %s1 = inlined_call_operand.hbm [shape: bf16[256,1024], index: 1, kind: input, shape index: {}]
  %s2 = inlined_call_operand.hbm [shape: f32[1,1024], index: 2, kind: input, shape index: {}]
  %s3 = inlined_call_operand.hbm [shape: bf16[1024,256], index: 3, kind: input, shape index: {}]
  %s4 = inlined_call_operand.vmem [shape: f32[1,256], index: 4, kind: input, shape index: {}]
  %s5 = inlined_call_operand.hbm [shape: f32[16,256], index: 5, kind: output, shape index: {}]
  %s6 = sld [smem:[#allocation0]]
  $region46: #{tpu_custom_call.1} parent=0
    _
  %s8 = ssub.s32 1, %s6
  %s9 = scalar_select 0, %s8, %s6
  $region1: #{tpu_custom_call.1} parent=0
    #allocation2 [shape = 'u8[8192]{0}', space=vmem, size = 0x2000, scoped, tag = 'input window, operand 0, single buffered']
    #allocation3 [shape = 's32[1]{0}', space=sflag, size = 0x4, scoped, tag = 'scoped memory for tpu_custom_call.1']
    #allocation4 [shape = 's32[1]{0}', space=sflag, size = 0x4, scoped, tag = 'scoped memory for tpu_custom_call.1']
    #allocation5 [shape = 'u8[524288]{0}', space=vmem, size = 0x80000, scoped, tag = 'input window, operand 1, single buffered']
    #allocation6 [shape = 's32[1]{0}', space=sflag, size = 0x4, scoped, tag = 'scoped memory for tpu_custom_call.1']
    #allocation7 [shape = 'u8[4096]{0}', space=vmem, size = 0x1000, scoped, tag = 'input window, operand 2, single buffered']
    #allocation8 [shape = 'u8[524288]{0}', space=vmem, size = 0x80000, scoped, tag = 'input window, operand 3, single buffered']
    #allocation9 [shape = 's32[1]{0}', space=sflag, size = 0x4, scoped, tag = 'scoped memory for tpu_custom_call.1']
    #allocation10 [shape = 'u8[16384]{0}', space=vmem, size = 0x4000, scoped, tag = 'output window, operand 0, single buffered']
    %10 = vsyncpa [#allocation3], 0
    %11 = vsyncpa [#allocation6], 0
    %12 = vsyncpa [#allocation9], 0
    %13 = vsyncpa [#allocation4], 0
    // Predicated region
    $region2: #{tpu_custom_call.1} parent=1 // pred_check
      _
    $region3: #{tpu_custom_call.1} parent=1 // pred_check_branch
      %15 = sbr.rel (0) target = $region5
    $region4: #{tpu_custom_call.1} parent=1 // pred_region
      %s17 = ssub.s32 256, 256
      %18 = vsyncadd [#allocation3], %s17
      %s19 = sshll.u32 [#allocation2], 4
      %s20 = int_to_ptr.vmem [resolvable:$true] %s19
      %25 = dma.hbm_to_vmem [thread:$0]  %s0, 256, %s20, [#allocation3], 128, 128, 8
    $region5: #{tpu_custom_call.1} parent=1 // pred_fallthru
      _
    // Predicated region
    $region6: #{tpu_custom_call.1} parent=1 // pred_check
      _
    $region7: #{tpu_custom_call.1} parent=1 // pred_check_branch
      %27 = sbr.rel (0) target = $region9
    $region8: #{tpu_custom_call.1} parent=1 // pred_region
      %s29 = ssub.s32 16384, 16384
      %30 = vsyncadd [#allocation6], %s29
      %s31 = sshll.u32 [#allocation5], 4
      %s32 = int_to_ptr.vmem [resolvable:$true] %s31
      %37 = dma.hbm_to_vmem [thread:$0]  %s1, 16384, %s32, [#allocation6], 512, 512, 32
    $region9: #{tpu_custom_call.1} parent=1 // pred_fallthru
      _
    // Predicated region
    $region10: #{tpu_custom_call.1} parent=1 // pred_check
      _
    $region11: #{tpu_custom_call.1} parent=1 // pred_check_branch
      %39 = sbr.rel (0) target = $region13
    $region12: #{tpu_custom_call.1} parent=1 // pred_region
      %s41 = ssub.s32 128, 128
      %42 = vsyncadd [#allocation6], %s41
      %s44 = sshll.u32 [#allocation7], 4
      %s45 = int_to_ptr.vmem [resolvable:$true] %s44
      %47 = dma.hbm_to_vmem [thread:$0]  %s2, 128, %s45, [#allocation6]
    $region13: #{tpu_custom_call.1} parent=1 // pred_fallthru
      _
    // Predicated region
    $region14: #{tpu_custom_call.1} parent=1 // pred_check
      _
    $region15: #{tpu_custom_call.1} parent=1 // pred_check_branch
      %49 = sbr.rel (0) target = $region17
    $region16: #{tpu_custom_call.1} parent=1 // pred_region
      %s51 = ssub.s32 16384, 16384
      %52 = vsyncadd [#allocation9], %s51
      %s53 = sshll.u32 [#allocation8], 4
      %s54 = int_to_ptr.vmem [resolvable:$true] %s53
      %59 = dma.hbm_to_vmem [thread:$0]  %s3, 16384, %s54, [#allocation9], 128, 128, 8
    $region17: #{tpu_custom_call.1} parent=1 // pred_fallthru
      _
    // Predicated region
    $region18: #{tpu_custom_call.1} parent=1 // pred_check
      _
    $region19: #{tpu_custom_call.1} parent=1 // pred_check_branch
      %61 = sbr.rel (0) target = $region21
    $region20: #{tpu_custom_call.1} parent=1 // pred_region
      _
    $region21: #{tpu_custom_call.1} parent=1 // pred_fallthru
      _
    // Predicated region
    $region22: #{tpu_custom_call.1} parent=1 // pred_check
      _
    $region23: #{tpu_custom_call.1} parent=1 // pred_check_branch
      %63 = sbr.rel (0) target = $region25
    $region24: #{tpu_custom_call.1} parent=1 // pred_region
      %64 = dma.done [#allocation3], 256
    $region25: #{tpu_custom_call.1} parent=1 // pred_fallthru
      _
    // Predicated region
    $region26: #{tpu_custom_call.1} parent=1 // pred_check
      _
    $region27: #{tpu_custom_call.1} parent=1 // pred_check_branch
      %66 = sbr.rel (0) target = $region29
    $region28: #{tpu_custom_call.1} parent=1 // pred_region
      %67 = dma.done [#allocation6], 16384
    $region29: #{tpu_custom_call.1} parent=1 // pred_fallthru
      _
    // Predicated region
    $region30: #{tpu_custom_call.1} parent=1 // pred_check
      _
    $region31: #{tpu_custom_call.1} parent=1 // pred_check_branch
      %69 = sbr.rel (0) target = $region33
    $region32: #{tpu_custom_call.1} parent=1 // pred_region
      %70 = dma.done [#allocation6], 128
    $region33: #{tpu_custom_call.1} parent=1 // pred_fallthru
      _
    // Predicated region
    $region34: #{tpu_custom_call.1} parent=1 // pred_check
      _
    $region35: #{tpu_custom_call.1} parent=1 // pred_check_branch
      %72 = sbr.rel (0) target = $region37
    $region36: #{tpu_custom_call.1} parent=1 // pred_region
      %73 = dma.done [#allocation9], 16384
    $region37: #{tpu_custom_call.1} parent=1 // pred_fallthru
      _
    %v74 = vld [vmem:[#allocation2] sm:$0xff]
    %v75 = vld [vmem:[#allocation2 + $0x8] sm:$0xff]
    %v76 = vld [vmem:[#allocation5] sm:$0xff]
    %v77 = vld [vmem:[#allocation5 + $0x8] sm:$0xff]
    %v78 = vld [vmem:[#allocation5 + $0x10] sm:$0xff]
    %v79 = vld [vmem:[#allocation5 + $0x18] sm:$0xff]
    %v80 = vld [vmem:[#allocation5 + $0x20] sm:$0xff]
    %v81 = vld [vmem:[#allocation5 + $0x28] sm:$0xff]
    %v82 = vld [vmem:[#allocation5 + $0x30] sm:$0xff]
    %v83 = vld [vmem:[#allocation5 + $0x38] sm:$0xff]
    %v84 = vld [vmem:[#allocation5 + $0x40] sm:$0xff]
    %v85 = vld [vmem:[#allocation5 + $0x48] sm:$0xff]
    %v86 = vld [vmem:[#allocation5 + $0x50] sm:$0xff]
    %v87 = vld [vmem:[#allocation5 + $0x58] sm:$0xff]
    %v88 = vld [vmem:[#allocation5 + $0x60] sm:$0xff]
    %v89 = vld [vmem:[#allocation5 + $0x68] sm:$0xff]
    %v90 = vld [vmem:[#allocation5 + $0x70] sm:$0xff]
    %v91 = vld [vmem:[#allocation5 + $0x78] sm:$0xff]
    %v92 = vld [vmem:[#allocation5 + $0x80] sm:$0xff]
    %v93 = vld [vmem:[#allocation5 + $0x88] sm:$0xff]
    %v94 = vld [vmem:[#allocation5 + $0x90] sm:$0xff]
    %v95 = vld [vmem:[#allocation5 + $0x98] sm:$0xff]
    %v96 = vld [vmem:[#allocation5 + $0xa0] sm:$0xff]
    %v97 = vld [vmem:[#allocation5 + $0xa8] sm:$0xff]
    %v98 = vld [vmem:[#allocation5 + $0xb0] sm:$0xff]
    %v99 = vld [vmem:[#allocation5 + $0xb8] sm:$0xff]
    %v100 = vld [vmem:[#allocation5 + $0xc0] sm:$0xff]
    %v101 = vld [vmem:[#allocation5 + $0xc8] sm:$0xff]
    %v102 = vld [vmem:[#allocation5 + $0xd0] sm:$0xff]
    %v103 = vld [vmem:[#allocation5 + $0xd8] sm:$0xff]
    %v104 = vld [vmem:[#allocation5 + $0xe0] sm:$0xff]
    %v105 = vld [vmem:[#allocation5 + $0xe8] sm:$0xff]
    %v106 = vld [vmem:[#allocation5 + $0xf0] sm:$0xff]
    %v107 = vld [vmem:[#allocation5 + $0xf8] sm:$0xff]
    %v108 = vld [vmem:[#allocation5 + $0x100] sm:$0xff]
    %v109 = vld [vmem:[#allocation5 + $0x108] sm:$0xff]
    %v110 = vld [vmem:[#allocation5 + $0x110] sm:$0xff]
    %v111 = vld [vmem:[#allocation5 + $0x118] sm:$0xff]
    %v112 = vld [vmem:[#allocation5 + $0x120] sm:$0xff]
    %v113 = vld [vmem:[#allocation5 + $0x128] sm:$0xff]
    %v114 = vld [vmem:[#allocation5 + $0x130] sm:$0xff]
    %v115 = vld [vmem:[#allocation5 + $0x138] sm:$0xff]
    %v116 = vld [vmem:[#allocation5 + $0x140] sm:$0xff]
    %v117 = vld [vmem:[#allocation5 + $0x148] sm:$0xff]
    %v118 = vld [vmem:[#allocation5 + $0x150] sm:$0xff]
    %v119 = vld [vmem:[#allocation5 + $0x158] sm:$0xff]
    %v120 = vld [vmem:[#allocation5 + $0x160] sm:$0xff]
    %v121 = vld [vmem:[#allocation5 + $0x168] sm:$0xff]
    %v122 = vld [vmem:[#allocation5 + $0x170] sm:$0xff]
    %v123 = vld [vmem:[#allocation5 + $0x178] sm:$0xff]
    %v124 = vld [vmem:[#allocation5 + $0x180] sm:$0xff]
    %v125 = vld [vmem:[#allocation5 + $0x188] sm:$0xff]
    %v126 = vld [vmem:[#allocation5 + $0x190] sm:$0xff]
    %v127 = vld [vmem:[#allocation5 + $0x198] sm:$0xff]
    %v128 = vld [vmem:[#allocation5 + $0x1a0] sm:$0xff]
    %v129 = vld [vmem:[#allocation5 + $0x1a8] sm:$0xff]
    %v130 = vld [vmem:[#allocation5 + $0x1b0] sm:$0xff]
    %v131 = vld [vmem:[#allocation5 + $0x1b8] sm:$0xff]
    %v132 = vld [vmem:[#allocation5 + $0x1c0] sm:$0xff]
    %v133 = vld [vmem:[#allocation5 + $0x1c8] sm:$0xff]
    %v134 = vld [vmem:[#allocation5 + $0x1d0] sm:$0xff]
    %v135 = vld [vmem:[#allocation5 + $0x1d8] sm:$0xff]
    %v136 = vld [vmem:[#allocation5 + $0x1e0] sm:$0xff]
    %v137 = vld [vmem:[#allocation5 + $0x1e8] sm:$0xff]
    %v138 = vld [vmem:[#allocation5 + $0x1f0] sm:$0xff]
    %v139 = vld [vmem:[#allocation5 + $0x1f8] sm:$0xff]
    %v140 = vld [vmem:[#allocation5 + $0x200] sm:$0xff]
    %v141 = vld [vmem:[#allocation5 + $0x208] sm:$0xff]
    %v142 = vld [vmem:[#allocation5 + $0x210] sm:$0xff]
    %v143 = vld [vmem:[#allocation5 + $0x218] sm:$0xff]
    %v144 = vld [vmem:[#allocation5 + $0x220] sm:$0xff]
    %v145 = vld [vmem:[#allocation5 + $0x228] sm:$0xff]
    %v146 = vld [vmem:[#allocation5 + $0x230] sm:$0xff]
    %v147 = vld [vmem:[#allocation5 + $0x238] sm:$0xff]
    %v148 = vld [vmem:[#allocation5 + $0x240] sm:$0xff]
    %v149 = vld [vmem:[#allocation5 + $0x248] sm:$0xff]
    %v150 = vld [vmem:[#allocation5 + $0x250] sm:$0xff]
    %v151 = vld [vmem:[#allocation5 + $0x258] sm:$0xff]
    %v152 = vld [vmem:[#allocation5 + $0x260] sm:$0xff]
    %v153 = vld [vmem:[#allocation5 + $0x268] sm:$0xff]
    %v154 = vld [vmem:[#allocation5 + $0x270] sm:$0xff]
    %v155 = vld [vmem:[#allocation5 + $0x278] sm:$0xff]
    %v156 = vld [vmem:[#allocation5 + $0x280] sm:$0xff]
    %v157 = vld [vmem:[#allocation5 + $0x288] sm:$0xff]
    %v158 = vld [vmem:[#allocation5 + $0x290] sm:$0xff]
    %v159 = vld [vmem:[#allocation5 + $0x298] sm:$0xff]
    %v160 = vld [vmem:[#allocation5 + $0x2a0] sm:$0xff]
    %v161 = vld [vmem:[#allocation5 + $0x2a8] sm:$0xff]
    %v162 = vld [vmem:[#allocation5 + $0x2b0] sm:$0xff]
    %v163 = vld [vmem:[#allocation5 + $0x2b8] sm:$0xff]
    %v164 = vld [vmem:[#allocation5 + $0x2c0] sm:$0xff]
    %v165 = vld [vmem:[#allocation5 + $0x2c8] sm:$0xff]
    %v166 = vld [vmem:[#allocation5 + $0x2d0] sm:$0xff]
    %v167 = vld [vmem:[#allocation5 + $0x2d8] sm:$0xff]
    %v168 = vld [vmem:[#allocation5 + $0x2e0] sm:$0xff]
    %v169 = vld [vmem:[#allocation5 + $0x2e8] sm:$0xff]
    %v170 = vld [vmem:[#allocation5 + $0x2f0] sm:$0xff]
    %v171 = vld [vmem:[#allocation5 + $0x2f8] sm:$0xff]
    %v172 = vld [vmem:[#allocation5 + $0x300] sm:$0xff]
    %v173 = vld [vmem:[#allocation5 + $0x308] sm:$0xff]
    %v174 = vld [vmem:[#allocation5 + $0x310] sm:$0xff]
    %v175 = vld [vmem:[#allocation5 + $0x318] sm:$0xff]
    %v176 = vld [vmem:[#allocation5 + $0x320] sm:$0xff]
    %v177 = vld [vmem:[#allocation5 + $0x328] sm:$0xff]
    %v178 = vld [vmem:[#allocation5 + $0x330] sm:$0xff]
    %v179 = vld [vmem:[#allocation5 + $0x338] sm:$0xff]
    %v180 = vld [vmem:[#allocation5 + $0x340] sm:$0xff]
    %v181 = vld [vmem:[#allocation5 + $0x348] sm:$0xff]
    %v182 = vld [vmem:[#allocation5 + $0x350] sm:$0xff]
    %v183 = vld [vmem:[#allocation5 + $0x358] sm:$0xff]
    %v184 = vld [vmem:[#allocation5 + $0x360] sm:$0xff]
    %v185 = vld [vmem:[#allocation5 + $0x368] sm:$0xff]
    %v186 = vld [vmem:[#allocation5 + $0x370] sm:$0xff]
    %v187 = vld [vmem:[#allocation5 + $0x378] sm:$0xff]
    %v188 = vld [vmem:[#allocation5 + $0x380] sm:$0xff]
    %v189 = vld [vmem:[#allocation5 + $0x388] sm:$0xff]
    %v190 = vld [vmem:[#allocation5 + $0x390] sm:$0xff]
    %v191 = vld [vmem:[#allocation5 + $0x398] sm:$0xff]
    %v192 = vld [vmem:[#allocation5 + $0x3a0] sm:$0xff]
    %v193 = vld [vmem:[#allocation5 + $0x3a8] sm:$0xff]
    %v194 = vld [vmem:[#allocation5 + $0x3b0] sm:$0xff]
    %v195 = vld [vmem:[#allocation5 + $0x3b8] sm:$0xff]
    %v196 = vld [vmem:[#allocation5 + $0x3c0] sm:$0xff]
    %v197 = vld [vmem:[#allocation5 + $0x3c8] sm:$0xff]
    %v198 = vld [vmem:[#allocation5 + $0x3d0] sm:$0xff]
    %v199 = vld [vmem:[#allocation5 + $0x3d8] sm:$0xff]
    %v200 = vld [vmem:[#allocation5 + $0x3e0] sm:$0xff]
    %v201 = vld [vmem:[#allocation5 + $0x3e8] sm:$0xff]
    %v202 = vld [vmem:[#allocation5 + $0x3f0] sm:$0xff]
    %v203 = vld [vmem:[#allocation5 + $0x3f8] sm:$0xff]
    %v204 = vld [vmem:[#allocation7] sm:$0xff]
    %v206 = vlaneseq
    %v207 = vshrl.u32 %v206, 7
    %v208 = vsub.s32 0, %v207
    %v209 = vrot.slane %v204, %v208
    %v210 = vlaneseq
    %v211 = vshrl.u32 %v210, 7
    %v212 = vsub.s32 1, %v211
    %v213 = vrot.slane %v204, %v212
    %v214 = vlaneseq
    %v215 = vshrl.u32 %v214, 7
    %v216 = vsub.s32 2, %v215
    %v217 = vrot.slane %v204, %v216
    %v218 = vlaneseq
    %v219 = vshrl.u32 %v218, 7
    %v220 = vsub.s32 3, %v219
    %v221 = vrot.slane %v204, %v220
    %v222 = vlaneseq
    %v223 = vshrl.u32 %v222, 7
    %v224 = vsub.s32 4, %v223
    %v225 = vrot.slane %v204, %v224
    %v226 = vlaneseq
    %v227 = vshrl.u32 %v226, 7
    %v228 = vsub.s32 5, %v227
    %v229 = vrot.slane %v204, %v228
    %v230 = vlaneseq
    %v231 = vshrl.u32 %v230, 7
    %v232 = vsub.s32 6, %v231
    %v233 = vrot.slane %v204, %v232
    %v234 = vlaneseq
    %v235 = vshrl.u32 %v234, 7
    %v236 = vsub.s32 7, %v235
    %v237 = vrot.slane %v204, %v236
    %v248 = vunpack.c.l.b16 %v74
    %v249 = vunpack.c.h.b16 %v74
    %v250 = vunpack.c.l.b16 %v75
    %v251 = vunpack.c.h.b16 %v75
    %v252 = vpack.c.b16 %v250, %v248
    %v253 = vpack.c.b16 %v251, %v249
    %v384 = vunpack.c.l.b16 %v76
    %v385 = vunpack.c.h.b16 %v76
    %v386 = vunpack.c.l.b16 %v77
    %v387 = vunpack.c.h.b16 %v77
    %v388 = vunpack.c.l.b16 %v78
    %v389 = vunpack.c.h.b16 %v78
    %v390 = vunpack.c.l.b16 %v79
    %v391 = vunpack.c.h.b16 %v79
    %v392 = vunpack.c.l.b16 %v80
    %v393 = vunpack.c.h.b16 %v80
    %v394 = vunpack.c.l.b16 %v81
    %v395 = vunpack.c.h.b16 %v81
    %v396 = vunpack.c.l.b16 %v82
    %v397 = vunpack.c.h.b16 %v82
    %v398 = vunpack.c.l.b16 %v83
    %v399 = vunpack.c.h.b16 %v83
    %v400 = vunpack.c.l.b16 %v84
    %v401 = vunpack.c.h.b16 %v84
    %v402 = vunpack.c.l.b16 %v85
    %v403 = vunpack.c.h.b16 %v85
    %v404 = vunpack.c.l.b16 %v86
    %v405 = vunpack.c.h.b16 %v86
    %v406 = vunpack.c.l.b16 %v87
    %v407 = vunpack.c.h.b16 %v87
    %v408 = vunpack.c.l.b16 %v88
    %v409 = vunpack.c.h.b16 %v88
    %v410 = vunpack.c.l.b16 %v89
    %v411 = vunpack.c.h.b16 %v89
    %v412 = vunpack.c.l.b16 %v90
    %v413 = vunpack.c.h.b16 %v90
    %v414 = vunpack.c.l.b16 %v91
    %v415 = vunpack.c.h.b16 %v91
    %v416 = vunpack.c.l.b16 %v92
    %v417 = vunpack.c.h.b16 %v92
    %v418 = vunpack.c.l.b16 %v93
    %v419 = vunpack.c.h.b16 %v93
    %v420 = vunpack.c.l.b16 %v94
    %v421 = vunpack.c.h.b16 %v94
    %v422 = vunpack.c.l.b16 %v95
    %v423 = vunpack.c.h.b16 %v95
    %v424 = vunpack.c.l.b16 %v96
    %v425 = vunpack.c.h.b16 %v96
    %v426 = vunpack.c.l.b16 %v97
    %v427 = vunpack.c.h.b16 %v97
    %v428 = vunpack.c.l.b16 %v98
    %v429 = vunpack.c.h.b16 %v98
    %v430 = vunpack.c.l.b16 %v99
    %v431 = vunpack.c.h.b16 %v99
    %v432 = vunpack.c.l.b16 %v100
    %v433 = vunpack.c.h.b16 %v100
    %v434 = vunpack.c.l.b16 %v101
    %v435 = vunpack.c.h.b16 %v101
    %v436 = vunpack.c.l.b16 %v102
    %v437 = vunpack.c.h.b16 %v102
    %v438 = vunpack.c.l.b16 %v103
    %v439 = vunpack.c.h.b16 %v103
    %v440 = vunpack.c.l.b16 %v104
    %v441 = vunpack.c.h.b16 %v104
    %v442 = vunpack.c.l.b16 %v105
    %v443 = vunpack.c.h.b16 %v105
    %v444 = vunpack.c.l.b16 %v106
    %v445 = vunpack.c.h.b16 %v106
    %v446 = vunpack.c.l.b16 %v107
    %v447 = vunpack.c.h.b16 %v107
    %v448 = vunpack.c.l.b16 %v108
    %v449 = vunpack.c.h.b16 %v108
    %v450 = vunpack.c.l.b16 %v109
    %v451 = vunpack.c.h.b16 %v109
    %v452 = vunpack.c.l.b16 %v110
    %v453 = vunpack.c.h.b16 %v110
    %v454 = vunpack.c.l.b16 %v111
    %v455 = vunpack.c.h.b16 %v111
    %v456 = vunpack.c.l.b16 %v112
    %v457 = vunpack.c.h.b16 %v112
    %v458 = vunpack.c.l.b16 %v113
    %v459 = vunpack.c.h.b16 %v113
    %v460 = vunpack.c.l.b16 %v114
    %v461 = vunpack.c.h.b16 %v114
    %v462 = vunpack.c.l.b16 %v115
    %v463 = vunpack.c.h.b16 %v115
    %v464 = vunpack.c.l.b16 %v116
    %v465 = vunpack.c.h.b16 %v116
    %v466 = vunpack.c.l.b16 %v117
    %v467 = vunpack.c.h.b16 %v117
    %v468 = vunpack.c.l.b16 %v118
    %v469 = vunpack.c.h.b16 %v118
    %v470 = vunpack.c.l.b16 %v119
    %v471 = vunpack.c.h.b16 %v119
    %v472 = vunpack.c.l.b16 %v120
    %v473 = vunpack.c.h.b16 %v120
    %v474 = vunpack.c.l.b16 %v121
    %v475 = vunpack.c.h.b16 %v121
    %v476 = vunpack.c.l.b16 %v122
    %v477 = vunpack.c.h.b16 %v122
    %v478 = vunpack.c.l.b16 %v123
    %v479 = vunpack.c.h.b16 %v123
    %v480 = vunpack.c.l.b16 %v124
    %v481 = vunpack.c.h.b16 %v124
    %v482 = vunpack.c.l.b16 %v125
    %v483 = vunpack.c.h.b16 %v125
    %v484 = vunpack.c.l.b16 %v126
    %v485 = vunpack.c.h.b16 %v126
    %v486 = vunpack.c.l.b16 %v127
    %v487 = vunpack.c.h.b16 %v127
    %v488 = vunpack.c.l.b16 %v128
    %v489 = vunpack.c.h.b16 %v128
    %v490 = vunpack.c.l.b16 %v129
    %v491 = vunpack.c.h.b16 %v129
    %v492 = vunpack.c.l.b16 %v130
    %v493 = vunpack.c.h.b16 %v130
    %v494 = vunpack.c.l.b16 %v131
    %v495 = vunpack.c.h.b16 %v131
    %v496 = vunpack.c.l.b16 %v132
    %v497 = vunpack.c.h.b16 %v132
    %v498 = vunpack.c.l.b16 %v133
    %v499 = vunpack.c.h.b16 %v133
    %v500 = vunpack.c.l.b16 %v134
    %v501 = vunpack.c.h.b16 %v134
    %v502 = vunpack.c.l.b16 %v135
    %v503 = vunpack.c.h.b16 %v135
    %v504 = vunpack.c.l.b16 %v136
    %v505 = vunpack.c.h.b16 %v136
    %v506 = vunpack.c.l.b16 %v137
    %v507 = vunpack.c.h.b16 %v137
    %v508 = vunpack.c.l.b16 %v138
    %v509 = vunpack.c.h.b16 %v138
    %v510 = vunpack.c.l.b16 %v139
    %v511 = vunpack.c.h.b16 %v139
    %v512 = vunpack.c.l.b16 %v140
    %v513 = vunpack.c.h.b16 %v140
    %v514 = vunpack.c.l.b16 %v141
    %v515 = vunpack.c.h.b16 %v141
    %v516 = vunpack.c.l.b16 %v142
    %v517 = vunpack.c.h.b16 %v142
    %v518 = vunpack.c.l.b16 %v143
    %v519 = vunpack.c.h.b16 %v143
    %v520 = vunpack.c.l.b16 %v144
    %v521 = vunpack.c.h.b16 %v144
    %v522 = vunpack.c.l.b16 %v145
    %v523 = vunpack.c.h.b16 %v145
    %v524 = vunpack.c.l.b16 %v146
    %v525 = vunpack.c.h.b16 %v146
    %v526 = vunpack.c.l.b16 %v147
    %v527 = vunpack.c.h.b16 %v147
    %v528 = vunpack.c.l.b16 %v148
    %v529 = vunpack.c.h.b16 %v148
    %v530 = vunpack.c.l.b16 %v149
    %v531 = vunpack.c.h.b16 %v149
    %v532 = vunpack.c.l.b16 %v150
    %v533 = vunpack.c.h.b16 %v150
    %v534 = vunpack.c.l.b16 %v151
    %v535 = vunpack.c.h.b16 %v151
    %v536 = vunpack.c.l.b16 %v152
    %v537 = vunpack.c.h.b16 %v152
    %v538 = vunpack.c.l.b16 %v153
    %v539 = vunpack.c.h.b16 %v153
    %v540 = vunpack.c.l.b16 %v154
    %v541 = vunpack.c.h.b16 %v154
    %v542 = vunpack.c.l.b16 %v155
    %v543 = vunpack.c.h.b16 %v155
    %v544 = vunpack.c.l.b16 %v156
    %v545 = vunpack.c.h.b16 %v156
    %v546 = vunpack.c.l.b16 %v157
    %v547 = vunpack.c.h.b16 %v157
    %v548 = vunpack.c.l.b16 %v158
    %v549 = vunpack.c.h.b16 %v158
    %v550 = vunpack.c.l.b16 %v159
    %v551 = vunpack.c.h.b16 %v159
    %v552 = vunpack.c.l.b16 %v160
    %v553 = vunpack.c.h.b16 %v160
    %v554 = vunpack.c.l.b16 %v161
    %v555 = vunpack.c.h.b16 %v161
    %v556 = vunpack.c.l.b16 %v162
    %v557 = vunpack.c.h.b16 %v162
    %v558 = vunpack.c.l.b16 %v163
    %v559 = vunpack.c.h.b16 %v163
    %v560 = vunpack.c.l.b16 %v164
    %v561 = vunpack.c.h.b16 %v164
    %v562 = vunpack.c.l.b16 %v165
    %v563 = vunpack.c.h.b16 %v165
    %v564 = vunpack.c.l.b16 %v166
    %v565 = vunpack.c.h.b16 %v166
    %v566 = vunpack.c.l.b16 %v167
    %v567 = vunpack.c.h.b16 %v167
    %v568 = vunpack.c.l.b16 %v168
    %v569 = vunpack.c.h.b16 %v168
    %v570 = vunpack.c.l.b16 %v169
    %v571 = vunpack.c.h.b16 %v169
    %v572 = vunpack.c.l.b16 %v170
    %v573 = vunpack.c.h.b16 %v170
    %v574 = vunpack.c.l.b16 %v171
    %v575 = vunpack.c.h.b16 %v171
    %v576 = vunpack.c.l.b16 %v172
    %v577 = vunpack.c.h.b16 %v172
    %v578 = vunpack.c.l.b16 %v173
    %v579 = vunpack.c.h.b16 %v173
    %v580 = vunpack.c.l.b16 %v174
    %v581 = vunpack.c.h.b16 %v174
    %v582 = vunpack.c.l.b16 %v175
    %v583 = vunpack.c.h.b16 %v175
    %v584 = vunpack.c.l.b16 %v176
    %v585 = vunpack.c.h.b16 %v176
    %v586 = vunpack.c.l.b16 %v177
    %v587 = vunpack.c.h.b16 %v177
    %v588 = vunpack.c.l.b16 %v178
    %v589 = vunpack.c.h.b16 %v178
    %v590 = vunpack.c.l.b16 %v179
    %v591 = vunpack.c.h.b16 %v179
    %v592 = vunpack.c.l.b16 %v180
    %v593 = vunpack.c.h.b16 %v180
    %v594 = vunpack.c.l.b16 %v181
    %v595 = vunpack.c.h.b16 %v181
    %v596 = vunpack.c.l.b16 %v182
    %v597 = vunpack.c.h.b16 %v182
    %v598 = vunpack.c.l.b16 %v183
    %v599 = vunpack.c.h.b16 %v183
    %v600 = vunpack.c.l.b16 %v184
    %v601 = vunpack.c.h.b16 %v184
    %v602 = vunpack.c.l.b16 %v185
    %v603 = vunpack.c.h.b16 %v185
    %v604 = vunpack.c.l.b16 %v186
    %v605 = vunpack.c.h.b16 %v186
    %v606 = vunpack.c.l.b16 %v187
    %v607 = vunpack.c.h.b16 %v187
    %v608 = vunpack.c.l.b16 %v188
    %v609 = vunpack.c.h.b16 %v188
    %v610 = vunpack.c.l.b16 %v189
    %v611 = vunpack.c.h.b16 %v189
    %v612 = vunpack.c.l.b16 %v190
    %v613 = vunpack.c.h.b16 %v190
    %v614 = vunpack.c.l.b16 %v191
    %v615 = vunpack.c.h.b16 %v191
    %v616 = vunpack.c.l.b16 %v192
    %v617 = vunpack.c.h.b16 %v192
    %v618 = vunpack.c.l.b16 %v193
    %v619 = vunpack.c.h.b16 %v193
    %v620 = vunpack.c.l.b16 %v194
    %v621 = vunpack.c.h.b16 %v194
    %v622 = vunpack.c.l.b16 %v195
    %v623 = vunpack.c.h.b16 %v195
    %v624 = vunpack.c.l.b16 %v196
    %v625 = vunpack.c.h.b16 %v196
    %v626 = vunpack.c.l.b16 %v197
    %v627 = vunpack.c.h.b16 %v197
    %v628 = vunpack.c.l.b16 %v198
    %v629 = vunpack.c.h.b16 %v198
    %v630 = vunpack.c.l.b16 %v199
    %v631 = vunpack.c.h.b16 %v199
    %v632 = vunpack.c.l.b16 %v200
    %v633 = vunpack.c.h.b16 %v200
    %v634 = vunpack.c.l.b16 %v201
    %v635 = vunpack.c.h.b16 %v201
    %v636 = vunpack.c.l.b16 %v202
    %v637 = vunpack.c.h.b16 %v202
    %v638 = vunpack.c.l.b16 %v203
    %v639 = vunpack.c.h.b16 %v203
    %v640 = vpack.c.b16 %v392, %v384
    %v641 = vpack.c.b16 %v393, %v385
    %v642 = vpack.c.b16 %v394, %v386
    %v643 = vpack.c.b16 %v395, %v387
    %v644 = vpack.c.b16 %v396, %v388
    %v645 = vpack.c.b16 %v397, %v389
    %v646 = vpack.c.b16 %v398, %v390
    %v647 = vpack.c.b16 %v399, %v391
    %v648 = vpack.c.b16 %v408, %v400
    %v649 = vpack.c.b16 %v409, %v401
    %v650 = vpack.c.b16 %v410, %v402
    %v651 = vpack.c.b16 %v411, %v403
    %v652 = vpack.c.b16 %v412, %v404
    %v653 = vpack.c.b16 %v413, %v405
    %v654 = vpack.c.b16 %v414, %v406
    %v655 = vpack.c.b16 %v415, %v407
    %v656 = vpack.c.b16 %v424, %v416
    %v657 = vpack.c.b16 %v425, %v417
    %v658 = vpack.c.b16 %v426, %v418
    %v659 = vpack.c.b16 %v427, %v419
    %v660 = vpack.c.b16 %v428, %v420
    %v661 = vpack.c.b16 %v429, %v421
    %v662 = vpack.c.b16 %v430, %v422
    %v663 = vpack.c.b16 %v431, %v423
    %v664 = vpack.c.b16 %v440, %v432
    %v665 = vpack.c.b16 %v441, %v433
    %v666 = vpack.c.b16 %v442, %v434
    %v667 = vpack.c.b16 %v443, %v435
    %v668 = vpack.c.b16 %v444, %v436
    %v669 = vpack.c.b16 %v445, %v437
    %v670 = vpack.c.b16 %v446, %v438
    %v671 = vpack.c.b16 %v447, %v439
    %v672 = vpack.c.b16 %v456, %v448
    %v673 = vpack.c.b16 %v457, %v449
    %v674 = vpack.c.b16 %v458, %v450
    %v675 = vpack.c.b16 %v459, %v451
    %v676 = vpack.c.b16 %v460, %v452
    %v677 = vpack.c.b16 %v461, %v453
    %v678 = vpack.c.b16 %v462, %v454
    %v679 = vpack.c.b16 %v463, %v455
    %v680 = vpack.c.b16 %v472, %v464
    %v681 = vpack.c.b16 %v473, %v465
    %v682 = vpack.c.b16 %v474, %v466
    %v683 = vpack.c.b16 %v475, %v467
    %v684 = vpack.c.b16 %v476, %v468
    %v685 = vpack.c.b16 %v477, %v469
    %v686 = vpack.c.b16 %v478, %v470
    %v687 = vpack.c.b16 %v479, %v471
    %v688 = vpack.c.b16 %v488, %v480
    %v689 = vpack.c.b16 %v489, %v481
    %v690 = vpack.c.b16 %v490, %v482
    %v691 = vpack.c.b16 %v491, %v483
    %v692 = vpack.c.b16 %v492, %v484
    %v693 = vpack.c.b16 %v493, %v485
    %v694 = vpack.c.b16 %v494, %v486
    %v695 = vpack.c.b16 %v495, %v487
    %v696 = vpack.c.b16 %v504, %v496
    %v697 = vpack.c.b16 %v505, %v497
    %v698 = vpack.c.b16 %v506, %v498
    %v699 = vpack.c.b16 %v507, %v499
    %v700 = vpack.c.b16 %v508, %v500
    %v701 = vpack.c.b16 %v509, %v501
    %v702 = vpack.c.b16 %v510, %v502
    %v703 = vpack.c.b16 %v511, %v503
    %v704 = vpack.c.b16 %v520, %v512
    %v705 = vpack.c.b16 %v521, %v513
    %v706 = vpack.c.b16 %v522, %v514
    %v707 = vpack.c.b16 %v523, %v515
    %v708 = vpack.c.b16 %v524, %v516
    %v709 = vpack.c.b16 %v525, %v517
    %v710 = vpack.c.b16 %v526, %v518
    %v711 = vpack.c.b16 %v527, %v519
    %v712 = vpack.c.b16 %v536, %v528
    %v713 = vpack.c.b16 %v537, %v529
    %v714 = vpack.c.b16 %v538, %v530
    %v715 = vpack.c.b16 %v539, %v531
    %v716 = vpack.c.b16 %v540, %v532
    %v717 = vpack.c.b16 %v541, %v533
    %v718 = vpack.c.b16 %v542, %v534
    %v719 = vpack.c.b16 %v543, %v535
    %v720 = vpack.c.b16 %v552, %v544
    %v721 = vpack.c.b16 %v553, %v545
    %v722 = vpack.c.b16 %v554, %v546
    %v723 = vpack.c.b16 %v555, %v547
    %v724 = vpack.c.b16 %v556, %v548
    %v725 = vpack.c.b16 %v557, %v549
    %v726 = vpack.c.b16 %v558, %v550
    %v727 = vpack.c.b16 %v559, %v551
    %v728 = vpack.c.b16 %v568, %v560
    %v729 = vpack.c.b16 %v569, %v561
    %v730 = vpack.c.b16 %v570, %v562
    %v731 = vpack.c.b16 %v571, %v563
    %v732 = vpack.c.b16 %v572, %v564
    %v733 = vpack.c.b16 %v573, %v565
    %v734 = vpack.c.b16 %v574, %v566
    %v735 = vpack.c.b16 %v575, %v567
    %v736 = vpack.c.b16 %v584, %v576
    %v737 = vpack.c.b16 %v585, %v577
    %v738 = vpack.c.b16 %v586, %v578
    %v739 = vpack.c.b16 %v587, %v579
    %v740 = vpack.c.b16 %v588, %v580
    %v741 = vpack.c.b16 %v589, %v581
    %v742 = vpack.c.b16 %v590, %v582
    %v743 = vpack.c.b16 %v591, %v583
    %v744 = vpack.c.b16 %v600, %v592
    %v745 = vpack.c.b16 %v601, %v593
    %v746 = vpack.c.b16 %v602, %v594
    %v747 = vpack.c.b16 %v603, %v595
    %v748 = vpack.c.b16 %v604, %v596
    %v749 = vpack.c.b16 %v605, %v597
    %v750 = vpack.c.b16 %v606, %v598
    %v751 = vpack.c.b16 %v607, %v599
    %v752 = vpack.c.b16 %v616, %v608
    %v753 = vpack.c.b16 %v617, %v609
    %v754 = vpack.c.b16 %v618, %v610
    %v755 = vpack.c.b16 %v619, %v611
    %v756 = vpack.c.b16 %v620, %v612
    %v757 = vpack.c.b16 %v621, %v613
    %v758 = vpack.c.b16 %v622, %v614
    %v759 = vpack.c.b16 %v623, %v615
    %v760 = vpack.c.b16 %v632, %v624
    %v761 = vpack.c.b16 %v633, %v625
    %v762 = vpack.c.b16 %v634, %v626
    %v763 = vpack.c.b16 %v635, %v627
    %v764 = vpack.c.b16 %v636, %v628
    %v765 = vpack.c.b16 %v637, %v629
    %v766 = vpack.c.b16 %v638, %v630
    %v767 = vpack.c.b16 %v639, %v631
    %896 = vmatprep.subr.bf16.mxu0 %v641
    %897 = vmatpush1.bf16.msra.mxu0 %v640
    %898 = vmatprep.subr.bf16.mxu0 %v649
    %899 = vmatpush1.bf16.msra.mxu0 %v648
    %900 = vmatprep.subr.bf16.mxu0 %v657
    %901 = vmatpush1.bf16.msra.mxu0 %v656
    %902 = vmatprep.subr.bf16.mxu0 %v665
    %903 = vmatpush1.bf16.msra.mxu0 %v664
    %904 = vmatprep.subr.bf16.mxu0 %v673
    %905 = vmatpush1.bf16.msra.mxu0 %v672
    %906 = vmatprep.subr.bf16.mxu0 %v681
    %907 = vmatpush1.bf16.msra.mxu0 %v680
    %908 = vmatprep.subr.bf16.mxu0 %v689
    %909 = vmatpush1.bf16.msra.mxu0 %v688
    %910 = vmatprep.subr.bf16.mxu0 %v697
    %911 = vmatpush1.bf16.msra.mxu0 %v696
    %912 = vmatprep.subr.bf16.mxu0 %v705
    %913 = vmatpush1.bf16.msra.mxu0 %v704
    %914 = vmatprep.subr.bf16.mxu0 %v713
    %915 = vmatpush1.bf16.msra.mxu0 %v712
    %916 = vmatprep.subr.bf16.mxu0 %v721
    %917 = vmatpush1.bf16.msra.mxu0 %v720
    %918 = vmatprep.subr.bf16.mxu0 %v729
    %919 = vmatpush1.bf16.msra.mxu0 %v728
    %920 = vmatprep.subr.bf16.mxu0 %v737
    %921 = vmatpush1.bf16.msra.mxu0 %v736
    %922 = vmatprep.subr.bf16.mxu0 %v745
    %923 = vmatpush1.bf16.msra.mxu0 %v744
    %924 = vmatprep.subr.bf16.mxu0 %v753
    %925 = vmatpush1.bf16.msra.mxu0 %v752
    %926 = vmatprep.subr.bf16.mxu0 %v761
    %927 = vmatpush1.bf16.msra.mxu0 %v760
    %928 = vmatprep.mubr.bf16.mxu0 %v253
    %929 = vmatmul.mubr.bf16.gmra.mrb[0].mxu0 %v252
    %v930 = vpop.f32.mrb[0].mxu0
    %v931 = vadd.f32 %v209, %v930
    %v932 = vpop.f32.mrb[0].mxu0
    %v933 = vadd.f32 %v213, %v932
    %v934 = vpop.f32.mrb[0].mxu0
    %v935 = vadd.f32 %v209, %v934
    %v936 = vpop.f32.mrb[0].mxu0
    %v937 = vadd.f32 %v213, %v936
    %938 = vdwg.mxu0
    %939 = vmatprep.subr.bf16.mxu0 %v643
    %940 = vmatpush1.bf16.msra.mxu0 %v642
    %941 = vmatprep.subr.bf16.mxu0 %v651
    %942 = vmatpush1.bf16.msra.mxu0 %v650
    %943 = vmatprep.subr.bf16.mxu0 %v659
    %944 = vmatpush1.bf16.msra.mxu0 %v658
    %945 = vmatprep.subr.bf16.mxu0 %v667
    %946 = vmatpush1.bf16.msra.mxu0 %v666
    %947 = vmatprep.subr.bf16.mxu0 %v675
    %948 = vmatpush1.bf16.msra.mxu0 %v674
    %949 = vmatprep.subr.bf16.mxu0 %v683
    %950 = vmatpush1.bf16.msra.mxu0 %v682
    %951 = vmatprep.subr.bf16.mxu0 %v691
    %952 = vmatpush1.bf16.msra.mxu0 %v690
    %953 = vmatprep.subr.bf16.mxu0 %v699
    %954 = vmatpush1.bf16.msra.mxu0 %v698
    %955 = vmatprep.subr.bf16.mxu0 %v707
    %956 = vmatpush1.bf16.msra.mxu0 %v706
    %957 = vmatprep.subr.bf16.mxu0 %v715
    %958 = vmatpush1.bf16.msra.mxu0 %v714
    %959 = vmatprep.subr.bf16.mxu0 %v723
    %960 = vmatpush1.bf16.msra.mxu0 %v722
    %961 = vmatprep.subr.bf16.mxu0 %v731
    %962 = vmatpush1.bf16.msra.mxu0 %v730
    %963 = vmatprep.subr.bf16.mxu0 %v739
    %964 = vmatpush1.bf16.msra.mxu0 %v738
    %965 = vmatprep.subr.bf16.mxu0 %v747
    %966 = vmatpush1.bf16.msra.mxu0 %v746
    %967 = vmatprep.subr.bf16.mxu0 %v755
    %968 = vmatpush1.bf16.msra.mxu0 %v754
    %969 = vmatprep.subr.bf16.mxu0 %v763
    %970 = vmatpush1.bf16.msra.mxu0 %v762
    %971 = vmatprep.mubr.bf16.mxu0 %v253
    %972 = vmatmul.mubr.bf16.gmra.mrb[0].mxu0 %v252
    %v973 = vpop.f32.mrb[0].mxu0
    %v974 = vadd.f32 %v217, %v973
    %v975 = vpop.f32.mrb[0].mxu0
    %v976 = vadd.f32 %v221, %v975
    %v977 = vpop.f32.mrb[0].mxu0
    %v978 = vadd.f32 %v217, %v977
    %v979 = vpop.f32.mrb[0].mxu0
    %v980 = vadd.f32 %v221, %v979
    %981 = vdwg.mxu0
    %982 = vmatprep.subr.bf16.mxu0 %v645
    %983 = vmatpush1.bf16.msra.mxu0 %v644
    %984 = vmatprep.subr.bf16.mxu0 %v653
    %985 = vmatpush1.bf16.msra.mxu0 %v652
    %986 = vmatprep.subr.bf16.mxu0 %v661
    %987 = vmatpush1.bf16.msra.mxu0 %v660
    %988 = vmatprep.subr.bf16.mxu0 %v669
    %989 = vmatpush1.bf16.msra.mxu0 %v668
    %990 = vmatprep.subr.bf16.mxu0 %v677
    %991 = vmatpush1.bf16.msra.mxu0 %v676
    %992 = vmatprep.subr.bf16.mxu0 %v685
    %993 = vmatpush1.bf16.msra.mxu0 %v684
    %994 = vmatprep.subr.bf16.mxu0 %v693
    %995 = vmatpush1.bf16.msra.mxu0 %v692
    %996 = vmatprep.subr.bf16.mxu0 %v701
    %997 = vmatpush1.bf16.msra.mxu0 %v700
    %998 = vmatprep.subr.bf16.mxu0 %v709
    %999 = vmatpush1.bf16.msra.mxu0 %v708
    %1000 = vmatprep.subr.bf16.mxu0 %v717
    %1001 = vmatpush1.bf16.msra.mxu0 %v716
    %1002 = vmatprep.subr.bf16.mxu0 %v725
    %1003 = vmatpush1.bf16.msra.mxu0 %v724
    %1004 = vmatprep.subr.bf16.mxu0 %v733
    %1005 = vmatpush1.bf16.msra.mxu0 %v732
    %1006 = vmatprep.subr.bf16.mxu0 %v741
    %1007 = vmatpush1.bf16.msra.mxu0 %v740
    %1008 = vmatprep.subr.bf16.mxu0 %v749
    %1009 = vmatpush1.bf16.msra.mxu0 %v748
    %1010 = vmatprep.subr.bf16.mxu0 %v757
    %1011 = vmatpush1.bf16.msra.mxu0 %v756
    %1012 = vmatprep.subr.bf16.mxu0 %v765
    %1013 = vmatpush1.bf16.msra.mxu0 %v764
    %1014 = vmatprep.mubr.bf16.mxu0 %v253
    %1015 = vmatmul.mubr.bf16.gmra.mrb[0].mxu0 %v252
    %v1016 = vpop.f32.mrb[0].mxu0
    %v1017 = vadd.f32 %v225, %v1016
    %v1018 = vpop.f32.mrb[0].mxu0
    %v1019 = vadd.f32 %v229, %v1018
    %v1020 = vpop.f32.mrb[0].mxu0
    %v1021 = vadd.f32 %v225, %v1020
    %v1022 = vpop.f32.mrb[0].mxu0
    %v1023 = vadd.f32 %v229, %v1022
    %1024 = vdwg.mxu0
    %1025 = vmatprep.subr.bf16.mxu0 %v647
    %1026 = vmatpush1.bf16.msra.mxu0 %v646
    %1027 = vmatprep.subr.bf16.mxu0 %v655
    %1028 = vmatpush1.bf16.msra.mxu0 %v654
    %1029 = vmatprep.subr.bf16.mxu0 %v663
    %1030 = vmatpush1.bf16.msra.mxu0 %v662
    %1031 = vmatprep.subr.bf16.mxu0 %v671
    %1032 = vmatpush1.bf16.msra.mxu0 %v670
    %1033 = vmatprep.subr.bf16.mxu0 %v679
    %1034 = vmatpush1.bf16.msra.mxu0 %v678
    %1035 = vmatprep.subr.bf16.mxu0 %v687
    %1036 = vmatpush1.bf16.msra.mxu0 %v686
    %1037 = vmatprep.subr.bf16.mxu0 %v695
    %1038 = vmatpush1.bf16.msra.mxu0 %v694
    %1039 = vmatprep.subr.bf16.mxu0 %v703
    %1040 = vmatpush1.bf16.msra.mxu0 %v702
    %1041 = vmatprep.subr.bf16.mxu0 %v711
    %1042 = vmatpush1.bf16.msra.mxu0 %v710
    %1043 = vmatprep.subr.bf16.mxu0 %v719
    %1044 = vmatpush1.bf16.msra.mxu0 %v718
    %1045 = vmatprep.subr.bf16.mxu0 %v727
    %1046 = vmatpush1.bf16.msra.mxu0 %v726
    %1047 = vmatprep.subr.bf16.mxu0 %v735
    %1048 = vmatpush1.bf16.msra.mxu0 %v734
    %1049 = vmatprep.subr.bf16.mxu0 %v743
    %1050 = vmatpush1.bf16.msra.mxu0 %v742
    %1051 = vmatprep.subr.bf16.mxu0 %v751
    %1052 = vmatpush1.bf16.msra.mxu0 %v750
    %1053 = vmatprep.subr.bf16.mxu0 %v759
    %1054 = vmatpush1.bf16.msra.mxu0 %v758
    %1055 = vmatprep.subr.bf16.mxu0 %v767
    %1056 = vmatpush1.bf16.msra.mxu0 %v766
    %1057 = vmatprep.mubr.bf16.mxu0 %v253
    %1058 = vmatmul.mubr.bf16.gmra.mrb[0].mxu0 %v252
    %v1059 = vpop.f32.mrb[0].mxu0
    %v1060 = vadd.f32 %v233, %v1059
    %v1061 = vpop.f32.mrb[0].mxu0
    %v1062 = vadd.f32 %v237, %v1061
    %v1063 = vpop.f32.mrb[0].mxu0
    %v1064 = vadd.f32 %v233, %v1063
    %v1065 = vpop.f32.mrb[0].mxu0
    %v1066 = vadd.f32 %v237, %v1065
    %1067 = vdwg.mxu0
    %v1068 = vmax.f32 %v931, 0.0
    %v1069 = vmax.f32 %v933, 0.0
    %v1070 = vmax.f32 %v974, 0.0
    %v1071 = vmax.f32 %v976, 0.0
    %v1072 = vmax.f32 %v1017, 0.0
    %v1073 = vmax.f32 %v1019, 0.0
    %v1074 = vmax.f32 %v1060, 0.0
    %v1075 = vmax.f32 %v1062, 0.0
    %v1076 = vmax.f32 %v935, 0.0
    %v1077 = vmax.f32 %v937, 0.0
    %v1078 = vmax.f32 %v978, 0.0
    %v1079 = vmax.f32 %v980, 0.0
    %v1080 = vmax.f32 %v1021, 0.0
    %v1081 = vmax.f32 %v1023, 0.0
    %v1082 = vmax.f32 %v1064, 0.0
    %v1083 = vmax.f32 %v1066, 0.0
    %v1084 = vpack.c.bf16 %v1076, %v1068
    %v1085 = vpack.c.bf16 %v1077, %v1069
    %v1086 = vpack.c.bf16 %v1078, %v1070
    %v1087 = vpack.c.bf16 %v1079, %v1071
    %v1088 = vpack.c.bf16 %v1080, %v1072
    %v1089 = vpack.c.bf16 %v1081, %v1073
    %v1090 = vpack.c.bf16 %v1082, %v1074
    %v1091 = vpack.c.bf16 %v1083, %v1075
    %v1092 = vld [vmem:[#allocation8] sm:$0xff]
    %v1093 = vld [vmem:[#allocation8 + $0x8] sm:$0xff]
    %v1094 = vld [vmem:[#allocation8 + $0x10] sm:$0xff]
    %v1095 = vld [vmem:[#allocation8 + $0x18] sm:$0xff]
    %v1096 = vld [vmem:[#allocation8 + $0x20] sm:$0xff]
    %v1097 = vld [vmem:[#allocation8 + $0x28] sm:$0xff]
    %v1098 = vld [vmem:[#allocation8 + $0x30] sm:$0xff]
    %v1099 = vld [vmem:[#allocation8 + $0x38] sm:$0xff]
    %v1100 = vld [vmem:[#allocation8 + $0x40] sm:$0xff]
    %v1101 = vld [vmem:[#allocation8 + $0x48] sm:$0xff]
    %v1102 = vld [vmem:[#allocation8 + $0x50] sm:$0xff]
    %v1103 = vld [vmem:[#allocation8 + $0x58] sm:$0xff]
    %v1104 = vld [vmem:[#allocation8 + $0x60] sm:$0xff]
    %v1105 = vld [vmem:[#allocation8 + $0x68] sm:$0xff]
    %v1106 = vld [vmem:[#allocation8 + $0x70] sm:$0xff]
    %v1107 = vld [vmem:[#allocation8 + $0x78] sm:$0xff]
    %v1108 = vld [vmem:[#allocation8 + $0x80] sm:$0xff]
    %v1109 = vld [vmem:[#allocation8 + $0x88] sm:$0xff]
    %v1110 = vld [vmem:[#allocation8 + $0x90] sm:$0xff]
    %v1111 = vld [vmem:[#allocation8 + $0x98] sm:$0xff]
    %v1112 = vld [vmem:[#allocation8 + $0xa0] sm:$0xff]
    %v1113 = vld [vmem:[#allocation8 + $0xa8] sm:$0xff]
    %v1114 = vld [vmem:[#allocation8 + $0xb0] sm:$0xff]
    %v1115 = vld [vmem:[#allocation8 + $0xb8] sm:$0xff]
    %v1116 = vld [vmem:[#allocation8 + $0xc0] sm:$0xff]
    %v1117 = vld [vmem:[#allocation8 + $0xc8] sm:$0xff]
    %v1118 = vld [vmem:[#allocation8 + $0xd0] sm:$0xff]
    %v1119 = vld [vmem:[#allocation8 + $0xd8] sm:$0xff]
    %v1120 = vld [vmem:[#allocation8 + $0xe0] sm:$0xff]
    %v1121 = vld [vmem:[#allocation8 + $0xe8] sm:$0xff]
    %v1122 = vld [vmem:[#allocation8 + $0xf0] sm:$0xff]
    %v1123 = vld [vmem:[#allocation8 + $0xf8] sm:$0xff]
    %v1124 = vld [vmem:[#allocation8 + $0x100] sm:$0xff]
    %v1125 = vld [vmem:[#allocation8 + $0x108] sm:$0xff]
    %v1126 = vld [vmem:[#allocation8 + $0x110] sm:$0xff]
    %v1127 = vld [vmem:[#allocation8 + $0x118] sm:$0xff]
    %v1128 = vld [vmem:[#allocation8 + $0x120] sm:$0xff]
    %v1129 = vld [vmem:[#allocation8 + $0x128] sm:$0xff]
    %v1130 = vld [vmem:[#allocation8 + $0x130] sm:$0xff]
    %v1131 = vld [vmem:[#allocation8 + $0x138] sm:$0xff]
    %v1132 = vld [vmem:[#allocation8 + $0x140] sm:$0xff]
    %v1133 = vld [vmem:[#allocation8 + $0x148] sm:$0xff]
    %v1134 = vld [vmem:[#allocation8 + $0x150] sm:$0xff]
    %v1135 = vld [vmem:[#allocation8 + $0x158] sm:$0xff]
    %v1136 = vld [vmem:[#allocation8 + $0x160] sm:$0xff]
    %v1137 = vld [vmem:[#allocation8 + $0x168] sm:$0xff]
    %v1138 = vld [vmem:[#allocation8 + $0x170] sm:$0xff]
    %v1139 = vld [vmem:[#allocation8 + $0x178] sm:$0xff]
    %v1140 = vld [vmem:[#allocation8 + $0x180] sm:$0xff]
    %v1141 = vld [vmem:[#allocation8 + $0x188] sm:$0xff]
    %v1142 = vld [vmem:[#allocation8 + $0x190] sm:$0xff]
    %v1143 = vld [vmem:[#allocation8 + $0x198] sm:$0xff]
    %v1144 = vld [vmem:[#allocation8 + $0x1a0] sm:$0xff]
    %v1145 = vld [vmem:[#allocation8 + $0x1a8] sm:$0xff]
    %v1146 = vld [vmem:[#allocation8 + $0x1b0] sm:$0xff]
    %v1147 = vld [vmem:[#allocation8 + $0x1b8] sm:$0xff]
    %v1148 = vld [vmem:[#allocation8 + $0x1c0] sm:$0xff]
    %v1149 = vld [vmem:[#allocation8 + $0x1c8] sm:$0xff]
    %v1150 = vld [vmem:[#allocation8 + $0x1d0] sm:$0xff]
    %v1151 = vld [vmem:[#allocation8 + $0x1d8] sm:$0xff]
    %v1152 = vld [vmem:[#allocation8 + $0x1e0] sm:$0xff]
    %v1153 = vld [vmem:[#allocation8 + $0x1e8] sm:$0xff]
    %v1154 = vld [vmem:[#allocation8 + $0x1f0] sm:$0xff]
    %v1155 = vld [vmem:[#allocation8 + $0x1f8] sm:$0xff]
    %v1156 = vld [vmem:[#allocation8 + $0x200] sm:$0xff]
    %v1157 = vld [vmem:[#allocation8 + $0x208] sm:$0xff]
    %v1158 = vld [vmem:[#allocation8 + $0x210] sm:$0xff]
    %v1159 = vld [vmem:[#allocation8 + $0x218] sm:$0xff]
    %v1160 = vld [vmem:[#allocation8 + $0x220] sm:$0xff]
    %v1161 = vld [vmem:[#allocation8 + $0x228] sm:$0xff]
    %v1162 = vld [vmem:[#allocation8 + $0x230] sm:$0xff]
    %v1163 = vld [vmem:[#allocation8 + $0x238] sm:$0xff]
    %v1164 = vld [vmem:[#allocation8 + $0x240] sm:$0xff]
    %v1165 = vld [vmem:[#allocation8 + $0x248] sm:$0xff]
    %v1166 = vld [vmem:[#allocation8 + $0x250] sm:$0xff]
    %v1167 = vld [vmem:[#allocation8 + $0x258] sm:$0xff]
    %v1168 = vld [vmem:[#allocation8 + $0x260] sm:$0xff]
    %v1169 = vld [vmem:[#allocation8 + $0x268] sm:$0xff]
    %v1170 = vld [vmem:[#allocation8 + $0x270] sm:$0xff]
    %v1171 = vld [vmem:[#allocation8 + $0x278] sm:$0xff]
    %v1172 = vld [vmem:[#allocation8 + $0x280] sm:$0xff]
    %v1173 = vld [vmem:[#allocation8 + $0x288] sm:$0xff]
    %v1174 = vld [vmem:[#allocation8 + $0x290] sm:$0xff]
    %v1175 = vld [vmem:[#allocation8 + $0x298] sm:$0xff]
    %v1176 = vld [vmem:[#allocation8 + $0x2a0] sm:$0xff]
    %v1177 = vld [vmem:[#allocation8 + $0x2a8] sm:$0xff]
    %v1178 = vld [vmem:[#allocation8 + $0x2b0] sm:$0xff]
    %v1179 = vld [vmem:[#allocation8 + $0x2b8] sm:$0xff]
    %v1180 = vld [vmem:[#allocation8 + $0x2c0] sm:$0xff]
    %v1181 = vld [vmem:[#allocation8 + $0x2c8] sm:$0xff]
    %v1182 = vld [vmem:[#allocation8 + $0x2d0] sm:$0xff]
    %v1183 = vld [vmem:[#allocation8 + $0x2d8] sm:$0xff]
    %v1184 = vld [vmem:[#allocation8 + $0x2e0] sm:$0xff]
    %v1185 = vld [vmem:[#allocation8 + $0x2e8] sm:$0xff]
    %v1186 = vld [vmem:[#allocation8 + $0x2f0] sm:$0xff]
    %v1187 = vld [vmem:[#allocation8 + $0x2f8] sm:$0xff]
    %v1188 = vld [vmem:[#allocation8 + $0x300] sm:$0xff]
    %v1189 = vld [vmem:[#allocation8 + $0x308] sm:$0xff]
    %v1190 = vld [vmem:[#allocation8 + $0x310] sm:$0xff]
    %v1191 = vld [vmem:[#allocation8 + $0x318] sm:$0xff]
    %v1192 = vld [vmem:[#allocation8 + $0x320] sm:$0xff]
    %v1193 = vld [vmem:[#allocation8 + $0x328] sm:$0xff]
    %v1194 = vld [vmem:[#allocation8 + $0x330] sm:$0xff]
    %v1195 = vld [vmem:[#allocation8 + $0x338] sm:$0xff]
    %v1196 = vld [vmem:[#allocation8 + $0x340] sm:$0xff]
    %v1197 = vld [vmem:[#allocation8 + $0x348] sm:$0xff]
    %v1198 = vld [vmem:[#allocation8 + $0x350] sm:$0xff]
    %v1199 = vld [vmem:[#allocation8 + $0x358] sm:$0xff]
    %v1200 = vld [vmem:[#allocation8 + $0x360] sm:$0xff]
    %v1201 = vld [vmem:[#allocation8 + $0x368] sm:$0xff]
    %v1202 = vld [vmem:[#allocation8 + $0x370] sm:$0xff]
    %v1203 = vld [vmem:[#allocation8 + $0x378] sm:$0xff]
    %v1204 = vld [vmem:[#allocation8 + $0x380] sm:$0xff]
    %v1205 = vld [vmem:[#allocation8 + $0x388] sm:$0xff]
    %v1206 = vld [vmem:[#allocation8 + $0x390] sm:$0xff]
    %v1207 = vld [vmem:[#allocation8 + $0x398] sm:$0xff]
    %v1208 = vld [vmem:[#allocation8 + $0x3a0] sm:$0xff]
    %v1209 = vld [vmem:[#allocation8 + $0x3a8] sm:$0xff]
    %v1210 = vld [vmem:[#allocation8 + $0x3b0] sm:$0xff]
    %v1211 = vld [vmem:[#allocation8 + $0x3b8] sm:$0xff]
    %v1212 = vld [vmem:[#allocation8 + $0x3c0] sm:$0xff]
    %v1213 = vld [vmem:[#allocation8 + $0x3c8] sm:$0xff]
    %v1214 = vld [vmem:[#allocation8 + $0x3d0] sm:$0xff]
    %v1215 = vld [vmem:[#allocation8 + $0x3d8] sm:$0xff]
    %v1216 = vld [vmem:[#allocation8 + $0x3e0] sm:$0xff]
    %v1217 = vld [vmem:[#allocation8 + $0x3e8] sm:$0xff]
    %v1218 = vld [vmem:[#allocation8 + $0x3f0] sm:$0xff]
    %v1219 = vld [vmem:[#allocation8 + $0x3f8] sm:$0xff]
    %v1220 = vld [vmem:[%s4] sm:$0x3]
    %v1222 = vlaneseq
    %v1223 = vshrl.u32 %v1222, 7
    %v1224 = vsub.s32 0, %v1223
    %v1225 = vrot.slane %v1220, %v1224
    %v1226 = vlaneseq
    %v1227 = vshrl.u32 %v1226, 7
    %v1228 = vsub.s32 1, %v1227
    %v1229 = vrot.slane %v1220, %v1228
    %v1360 = vunpack.c.l.b16 %v1092
    %v1361 = vunpack.c.h.b16 %v1092
    %v1362 = vunpack.c.l.b16 %v1093
    %v1363 = vunpack.c.h.b16 %v1093
    %v1364 = vunpack.c.l.b16 %v1094
    %v1365 = vunpack.c.h.b16 %v1094
    %v1366 = vunpack.c.l.b16 %v1095
    %v1367 = vunpack.c.h.b16 %v1095
    %v1368 = vunpack.c.l.b16 %v1096
    %v1369 = vunpack.c.h.b16 %v1096
    %v1370 = vunpack.c.l.b16 %v1097
    %v1371 = vunpack.c.h.b16 %v1097
    %v1372 = vunpack.c.l.b16 %v1098
    %v1373 = vunpack.c.h.b16 %v1098
    %v1374 = vunpack.c.l.b16 %v1099
    %v1375 = vunpack.c.h.b16 %v1099
    %v1376 = vunpack.c.l.b16 %v1100
    %v1377 = vunpack.c.h.b16 %v1100
    %v1378 = vunpack.c.l.b16 %v1101
    %v1379 = vunpack.c.h.b16 %v1101
    %v1380 = vunpack.c.l.b16 %v1102
    %v1381 = vunpack.c.h.b16 %v1102
    %v1382 = vunpack.c.l.b16 %v1103
    %v1383 = vunpack.c.h.b16 %v1103
    %v1384 = vunpack.c.l.b16 %v1104
    %v1385 = vunpack.c.h.b16 %v1104
    %v1386 = vunpack.c.l.b16 %v1105
    %v1387 = vunpack.c.h.b16 %v1105
    %v1388 = vunpack.c.l.b16 %v1106
    %v1389 = vunpack.c.h.b16 %v1106
    %v1390 = vunpack.c.l.b16 %v1107
    %v1391 = vunpack.c.h.b16 %v1107
    %v1392 = vunpack.c.l.b16 %v1108
    %v1393 = vunpack.c.h.b16 %v1108
    %v1394 = vunpack.c.l.b16 %v1109
    %v1395 = vunpack.c.h.b16 %v1109
    %v1396 = vunpack.c.l.b16 %v1110
    %v1397 = vunpack.c.h.b16 %v1110
    %v1398 = vunpack.c.l.b16 %v1111
    %v1399 = vunpack.c.h.b16 %v1111
    %v1400 = vunpack.c.l.b16 %v1112
    %v1401 = vunpack.c.h.b16 %v1112
    %v1402 = vunpack.c.l.b16 %v1113
    %v1403 = vunpack.c.h.b16 %v1113
    %v1404 = vunpack.c.l.b16 %v1114
    %v1405 = vunpack.c.h.b16 %v1114
    %v1406 = vunpack.c.l.b16 %v1115
    %v1407 = vunpack.c.h.b16 %v1115
    %v1408 = vunpack.c.l.b16 %v1116
    %v1409 = vunpack.c.h.b16 %v1116
    %v1410 = vunpack.c.l.b16 %v1117
    %v1411 = vunpack.c.h.b16 %v1117
    %v1412 = vunpack.c.l.b16 %v1118
    %v1413 = vunpack.c.h.b16 %v1118
    %v1414 = vunpack.c.l.b16 %v1119
    %v1415 = vunpack.c.h.b16 %v1119
    %v1416 = vunpack.c.l.b16 %v1120
    %v1417 = vunpack.c.h.b16 %v1120
    %v1418 = vunpack.c.l.b16 %v1121
    %v1419 = vunpack.c.h.b16 %v1121
    %v1420 = vunpack.c.l.b16 %v1122
    %v1421 = vunpack.c.h.b16 %v1122
    %v1422 = vunpack.c.l.b16 %v1123
    %v1423 = vunpack.c.h.b16 %v1123
    %v1424 = vunpack.c.l.b16 %v1124
    %v1425 = vunpack.c.h.b16 %v1124
    %v1426 = vunpack.c.l.b16 %v1125
    %v1427 = vunpack.c.h.b16 %v1125
    %v1428 = vunpack.c.l.b16 %v1126
    %v1429 = vunpack.c.h.b16 %v1126
    %v1430 = vunpack.c.l.b16 %v1127
    %v1431 = vunpack.c.h.b16 %v1127
    %v1432 = vunpack.c.l.b16 %v1128
    %v1433 = vunpack.c.h.b16 %v1128
    %v1434 = vunpack.c.l.b16 %v1129
    %v1435 = vunpack.c.h.b16 %v1129
    %v1436 = vunpack.c.l.b16 %v1130
    %v1437 = vunpack.c.h.b16 %v1130
    %v1438 = vunpack.c.l.b16 %v1131
    %v1439 = vunpack.c.h.b16 %v1131
    %v1440 = vunpack.c.l.b16 %v1132
    %v1441 = vunpack.c.h.b16 %v1132
    %v1442 = vunpack.c.l.b16 %v1133
    %v1443 = vunpack.c.h.b16 %v1133
    %v1444 = vunpack.c.l.b16 %v1134
    %v1445 = vunpack.c.h.b16 %v1134
    %v1446 = vunpack.c.l.b16 %v1135
    %v1447 = vunpack.c.h.b16 %v1135
    %v1448 = vunpack.c.l.b16 %v1136
    %v1449 = vunpack.c.h.b16 %v1136
    %v1450 = vunpack.c.l.b16 %v1137
    %v1451 = vunpack.c.h.b16 %v1137
    %v1452 = vunpack.c.l.b16 %v1138
    %v1453 = vunpack.c.h.b16 %v1138
    %v1454 = vunpack.c.l.b16 %v1139
    %v1455 = vunpack.c.h.b16 %v1139
    %v1456 = vunpack.c.l.b16 %v1140
    %v1457 = vunpack.c.h.b16 %v1140
    %v1458 = vunpack.c.l.b16 %v1141
    %v1459 = vunpack.c.h.b16 %v1141
    %v1460 = vunpack.c.l.b16 %v1142
    %v1461 = vunpack.c.h.b16 %v1142
    %v1462 = vunpack.c.l.b16 %v1143
    %v1463 = vunpack.c.h.b16 %v1143
    %v1464 = vunpack.c.l.b16 %v1144
    %v1465 = vunpack.c.h.b16 %v1144
    %v1466 = vunpack.c.l.b16 %v1145
    %v1467 = vunpack.c.h.b16 %v1145
    %v1468 = vunpack.c.l.b16 %v1146
    %v1469 = vunpack.c.h.b16 %v1146
    %v1470 = vunpack.c.l.b16 %v1147
    %v1471 = vunpack.c.h.b16 %v1147
    %v1472 = vunpack.c.l.b16 %v1148
    %v1473 = vunpack.c.h.b16 %v1148
    %v1474 = vunpack.c.l.b16 %v1149
    %v1475 = vunpack.c.h.b16 %v1149
    %v1476 = vunpack.c.l.b16 %v1150
    %v1477 = vunpack.c.h.b16 %v1150
    %v1478 = vunpack.c.l.b16 %v1151
    %v1479 = vunpack.c.h.b16 %v1151
    %v1480 = vunpack.c.l.b16 %v1152
    %v1481 = vunpack.c.h.b16 %v1152
    %v1482 = vunpack.c.l.b16 %v1153
    %v1483 = vunpack.c.h.b16 %v1153
    %v1484 = vunpack.c.l.b16 %v1154
    %v1485 = vunpack.c.h.b16 %v1154
    %v1486 = vunpack.c.l.b16 %v1155
    %v1487 = vunpack.c.h.b16 %v1155
    %v1488 = vunpack.c.l.b16 %v1156
    %v1489 = vunpack.c.h.b16 %v1156
    %v1490 = vunpack.c.l.b16 %v1157
    %v1491 = vunpack.c.h.b16 %v1157
    %v1492 = vunpack.c.l.b16 %v1158
    %v1493 = vunpack.c.h.b16 %v1158
    %v1494 = vunpack.c.l.b16 %v1159
    %v1495 = vunpack.c.h.b16 %v1159
    %v1496 = vunpack.c.l.b16 %v1160
    %v1497 = vunpack.c.h.b16 %v1160
    %v1498 = vunpack.c.l.b16 %v1161
    %v1499 = vunpack.c.h.b16 %v1161
    %v1500 = vunpack.c.l.b16 %v1162
    %v1501 = vunpack.c.h.b16 %v1162
    %v1502 = vunpack.c.l.b16 %v1163
    %v1503 = vunpack.c.h.b16 %v1163
    %v1504 = vunpack.c.l.b16 %v1164
    %v1505 = vunpack.c.h.b16 %v1164
    %v1506 = vunpack.c.l.b16 %v1165
    %v1507 = vunpack.c.h.b16 %v1165
    %v1508 = vunpack.c.l.b16 %v1166
    %v1509 = vunpack.c.h.b16 %v1166
    %v1510 = vunpack.c.l.b16 %v1167
    %v1511 = vunpack.c.h.b16 %v1167
    %v1512 = vunpack.c.l.b16 %v1168
    %v1513 = vunpack.c.h.b16 %v1168
    %v1514 = vunpack.c.l.b16 %v1169
    %v1515 = vunpack.c.h.b16 %v1169
    %v1516 = vunpack.c.l.b16 %v1170
    %v1517 = vunpack.c.h.b16 %v1170
    %v1518 = vunpack.c.l.b16 %v1171
    %v1519 = vunpack.c.h.b16 %v1171
    %v1520 = vunpack.c.l.b16 %v1172
    %v1521 = vunpack.c.h.b16 %v1172
    %v1522 = vunpack.c.l.b16 %v1173
    %v1523 = vunpack.c.h.b16 %v1173
    %v1524 = vunpack.c.l.b16 %v1174
    %v1525 = vunpack.c.h.b16 %v1174
    %v1526 = vunpack.c.l.b16 %v1175
    %v1527 = vunpack.c.h.b16 %v1175
    %v1528 = vunpack.c.l.b16 %v1176
    %v1529 = vunpack.c.h.b16 %v1176
    %v1530 = vunpack.c.l.b16 %v1177
    %v1531 = vunpack.c.h.b16 %v1177
    %v1532 = vunpack.c.l.b16 %v1178
    %v1533 = vunpack.c.h.b16 %v1178
    %v1534 = vunpack.c.l.b16 %v1179
    %v1535 = vunpack.c.h.b16 %v1179
    %v1536 = vunpack.c.l.b16 %v1180
    %v1537 = vunpack.c.h.b16 %v1180
    %v1538 = vunpack.c.l.b16 %v1181
    %v1539 = vunpack.c.h.b16 %v1181
    %v1540 = vunpack.c.l.b16 %v1182
    %v1541 = vunpack.c.h.b16 %v1182
    %v1542 = vunpack.c.l.b16 %v1183
    %v1543 = vunpack.c.h.b16 %v1183
    %v1544 = vunpack.c.l.b16 %v1184
    %v1545 = vunpack.c.h.b16 %v1184
    %v1546 = vunpack.c.l.b16 %v1185
    %v1547 = vunpack.c.h.b16 %v1185
    %v1548 = vunpack.c.l.b16 %v1186
    %v1549 = vunpack.c.h.b16 %v1186
    %v1550 = vunpack.c.l.b16 %v1187
    %v1551 = vunpack.c.h.b16 %v1187
    %v1552 = vunpack.c.l.b16 %v1188
    %v1553 = vunpack.c.h.b16 %v1188
    %v1554 = vunpack.c.l.b16 %v1189
    %v1555 = vunpack.c.h.b16 %v1189
    %v1556 = vunpack.c.l.b16 %v1190
    %v1557 = vunpack.c.h.b16 %v1190
    %v1558 = vunpack.c.l.b16 %v1191
    %v1559 = vunpack.c.h.b16 %v1191
    %v1560 = vunpack.c.l.b16 %v1192
    %v1561 = vunpack.c.h.b16 %v1192
    %v1562 = vunpack.c.l.b16 %v1193
    %v1563 = vunpack.c.h.b16 %v1193
    %v1564 = vunpack.c.l.b16 %v1194
    %v1565 = vunpack.c.h.b16 %v1194
    %v1566 = vunpack.c.l.b16 %v1195
    %v1567 = vunpack.c.h.b16 %v1195
    %v1568 = vunpack.c.l.b16 %v1196
    %v1569 = vunpack.c.h.b16 %v1196
    %v1570 = vunpack.c.l.b16 %v1197
    %v1571 = vunpack.c.h.b16 %v1197
    %v1572 = vunpack.c.l.b16 %v1198
    %v1573 = vunpack.c.h.b16 %v1198
    %v1574 = vunpack.c.l.b16 %v1199
    %v1575 = vunpack.c.h.b16 %v1199
    %v1576 = vunpack.c.l.b16 %v1200
    %v1577 = vunpack.c.h.b16 %v1200
    %v1578 = vunpack.c.l.b16 %v1201
    %v1579 = vunpack.c.h.b16 %v1201
    %v1580 = vunpack.c.l.b16 %v1202
    %v1581 = vunpack.c.h.b16 %v1202
    %v1582 = vunpack.c.l.b16 %v1203
    %v1583 = vunpack.c.h.b16 %v1203
    %v1584 = vunpack.c.l.b16 %v1204
    %v1585 = vunpack.c.h.b16 %v1204
    %v1586 = vunpack.c.l.b16 %v1205
    %v1587 = vunpack.c.h.b16 %v1205
    %v1588 = vunpack.c.l.b16 %v1206
    %v1589 = vunpack.c.h.b16 %v1206
    %v1590 = vunpack.c.l.b16 %v1207
    %v1591 = vunpack.c.h.b16 %v1207
    %v1592 = vunpack.c.l.b16 %v1208
    %v1593 = vunpack.c.h.b16 %v1208
    %v1594 = vunpack.c.l.b16 %v1209
    %v1595 = vunpack.c.h.b16 %v1209
    %v1596 = vunpack.c.l.b16 %v1210
    %v1597 = vunpack.c.h.b16 %v1210
    %v1598 = vunpack.c.l.b16 %v1211
    %v1599 = vunpack.c.h.b16 %v1211
    %v1600 = vunpack.c.l.b16 %v1212
    %v1601 = vunpack.c.h.b16 %v1212
    %v1602 = vunpack.c.l.b16 %v1213
    %v1603 = vunpack.c.h.b16 %v1213
    %v1604 = vunpack.c.l.b16 %v1214
    %v1605 = vunpack.c.h.b16 %v1214
    %v1606 = vunpack.c.l.b16 %v1215
    %v1607 = vunpack.c.h.b16 %v1215
    %v1608 = vunpack.c.l.b16 %v1216
    %v1609 = vunpack.c.h.b16 %v1216
    %v1610 = vunpack.c.l.b16 %v1217
    %v1611 = vunpack.c.h.b16 %v1217
    %v1612 = vunpack.c.l.b16 %v1218
    %v1613 = vunpack.c.h.b16 %v1218
    %v1614 = vunpack.c.l.b16 %v1219
    %v1615 = vunpack.c.h.b16 %v1219
    %v1616 = vpack.c.b16 %v1362, %v1360
    %v1617 = vpack.c.b16 %v1363, %v1361
    %v1618 = vpack.c.b16 %v1366, %v1364
    %v1619 = vpack.c.b16 %v1367, %v1365
    %v1620 = vpack.c.b16 %v1370, %v1368
    %v1621 = vpack.c.b16 %v1371, %v1369
    %v1622 = vpack.c.b16 %v1374, %v1372
    %v1623 = vpack.c.b16 %v1375, %v1373
    %v1624 = vpack.c.b16 %v1378, %v1376
    %v1625 = vpack.c.b16 %v1379, %v1377
    %v1626 = vpack.c.b16 %v1382, %v1380
    %v1627 = vpack.c.b16 %v1383, %v1381
    %v1628 = vpack.c.b16 %v1386, %v1384
    %v1629 = vpack.c.b16 %v1387, %v1385
    %v1630 = vpack.c.b16 %v1390, %v1388
    %v1631 = vpack.c.b16 %v1391, %v1389
    %v1632 = vpack.c.b16 %v1394, %v1392
    %v1633 = vpack.c.b16 %v1395, %v1393
    %v1634 = vpack.c.b16 %v1398, %v1396
    %v1635 = vpack.c.b16 %v1399, %v1397
    %v1636 = vpack.c.b16 %v1402, %v1400
    %v1637 = vpack.c.b16 %v1403, %v1401
    %v1638 = vpack.c.b16 %v1406, %v1404
    %v1639 = vpack.c.b16 %v1407, %v1405
    %v1640 = vpack.c.b16 %v1410, %v1408
    %v1641 = vpack.c.b16 %v1411, %v1409
    %v1642 = vpack.c.b16 %v1414, %v1412
    %v1643 = vpack.c.b16 %v1415, %v1413
    %v1644 = vpack.c.b16 %v1418, %v1416
    %v1645 = vpack.c.b16 %v1419, %v1417
    %v1646 = vpack.c.b16 %v1422, %v1420
    %v1647 = vpack.c.b16 %v1423, %v1421
    %v1648 = vpack.c.b16 %v1426, %v1424
    %v1649 = vpack.c.b16 %v1427, %v1425
    %v1650 = vpack.c.b16 %v1430, %v1428
    %v1651 = vpack.c.b16 %v1431, %v1429
    %v1652 = vpack.c.b16 %v1434, %v1432
    %v1653 = vpack.c.b16 %v1435, %v1433
    %v1654 = vpack.c.b16 %v1438, %v1436
    %v1655 = vpack.c.b16 %v1439, %v1437
    %v1656 = vpack.c.b16 %v1442, %v1440
    %v1657 = vpack.c.b16 %v1443, %v1441
    %v1658 = vpack.c.b16 %v1446, %v1444
    %v1659 = vpack.c.b16 %v1447, %v1445
    %v1660 = vpack.c.b16 %v1450, %v1448
    %v1661 = vpack.c.b16 %v1451, %v1449
    %v1662 = vpack.c.b16 %v1454, %v1452
    %v1663 = vpack.c.b16 %v1455, %v1453
    %v1664 = vpack.c.b16 %v1458, %v1456
    %v1665 = vpack.c.b16 %v1459, %v1457
    %v1666 = vpack.c.b16 %v1462, %v1460
    %v1667 = vpack.c.b16 %v1463, %v1461
    %v1668 = vpack.c.b16 %v1466, %v1464
    %v1669 = vpack.c.b16 %v1467, %v1465
    %v1670 = vpack.c.b16 %v1470, %v1468
    %v1671 = vpack.c.b16 %v1471, %v1469
    %v1672 = vpack.c.b16 %v1474, %v1472
    %v1673 = vpack.c.b16 %v1475, %v1473
    %v1674 = vpack.c.b16 %v1478, %v1476
    %v1675 = vpack.c.b16 %v1479, %v1477
    %v1676 = vpack.c.b16 %v1482, %v1480
    %v1677 = vpack.c.b16 %v1483, %v1481
    %v1678 = vpack.c.b16 %v1486, %v1484
    %v1679 = vpack.c.b16 %v1487, %v1485
    %v1680 = vpack.c.b16 %v1490, %v1488
    %v1681 = vpack.c.b16 %v1491, %v1489
    %v1682 = vpack.c.b16 %v1494, %v1492
    %v1683 = vpack.c.b16 %v1495, %v1493
    %v1684 = vpack.c.b16 %v1498, %v1496
    %v1685 = vpack.c.b16 %v1499, %v1497
    %v1686 = vpack.c.b16 %v1502, %v1500
    %v1687 = vpack.c.b16 %v1503, %v1501
    %v1688 = vpack.c.b16 %v1506, %v1504
    %v1689 = vpack.c.b16 %v1507, %v1505
    %v1690 = vpack.c.b16 %v1510, %v1508
    %v1691 = vpack.c.b16 %v1511, %v1509
    %v1692 = vpack.c.b16 %v1514, %v1512
    %v1693 = vpack.c.b16 %v1515, %v1513
    %v1694 = vpack.c.b16 %v1518, %v1516
    %v1695 = vpack.c.b16 %v1519, %v1517
    %v1696 = vpack.c.b16 %v1522, %v1520
    %v1697 = vpack.c.b16 %v1523, %v1521
    %v1698 = vpack.c.b16 %v1526, %v1524
    %v1699 = vpack.c.b16 %v1527, %v1525
    %v1700 = vpack.c.b16 %v1530, %v1528
    %v1701 = vpack.c.b16 %v1531, %v1529
    %v1702 = vpack.c.b16 %v1534, %v1532
    %v1703 = vpack.c.b16 %v1535, %v1533
    %v1704 = vpack.c.b16 %v1538, %v1536
    %v1705 = vpack.c.b16 %v1539, %v1537
    %v1706 = vpack.c.b16 %v1542, %v1540
    %v1707 = vpack.c.b16 %v1543, %v1541
    %v1708 = vpack.c.b16 %v1546, %v1544
    %v1709 = vpack.c.b16 %v1547, %v1545
    %v1710 = vpack.c.b16 %v1550, %v1548
    %v1711 = vpack.c.b16 %v1551, %v1549
    %v1712 = vpack.c.b16 %v1554, %v1552
    %v1713 = vpack.c.b16 %v1555, %v1553
    %v1714 = vpack.c.b16 %v1558, %v1556
    %v1715 = vpack.c.b16 %v1559, %v1557
    %v1716 = vpack.c.b16 %v1562, %v1560
    %v1717 = vpack.c.b16 %v1563, %v1561
    %v1718 = vpack.c.b16 %v1566, %v1564
    %v1719 = vpack.c.b16 %v1567, %v1565
    %v1720 = vpack.c.b16 %v1570, %v1568
    %v1721 = vpack.c.b16 %v1571, %v1569
    %v1722 = vpack.c.b16 %v1574, %v1572
    %v1723 = vpack.c.b16 %v1575, %v1573
    %v1724 = vpack.c.b16 %v1578, %v1576
    %v1725 = vpack.c.b16 %v1579, %v1577
    %v1726 = vpack.c.b16 %v1582, %v1580
    %v1727 = vpack.c.b16 %v1583, %v1581
    %v1728 = vpack.c.b16 %v1586, %v1584
    %v1729 = vpack.c.b16 %v1587, %v1585
    %v1730 = vpack.c.b16 %v1590, %v1588
    %v1731 = vpack.c.b16 %v1591, %v1589
    %v1732 = vpack.c.b16 %v1594, %v1592
    %v1733 = vpack.c.b16 %v1595, %v1593
    %v1734 = vpack.c.b16 %v1598, %v1596
    %v1735 = vpack.c.b16 %v1599, %v1597
    %v1736 = vpack.c.b16 %v1602, %v1600
    %v1737 = vpack.c.b16 %v1603, %v1601
    %v1738 = vpack.c.b16 %v1606, %v1604
    %v1739 = vpack.c.b16 %v1607, %v1605
    %v1740 = vpack.c.b16 %v1610, %v1608
    %v1741 = vpack.c.b16 %v1611, %v1609
    %v1742 = vpack.c.b16 %v1614, %v1612
    %v1743 = vpack.c.b16 %v1615, %v1613
    %1872 = vmatprep.subr.bf16.mxu0 %v1617
    %1873 = vmatpush1.bf16.msra.mxu0 %v1616
    %1874 = vmatprep.subr.bf16.mxu0 %v1619
    %1875 = vmatpush1.bf16.msra.mxu0 %v1618
    %1876 = vmatprep.subr.bf16.mxu0 %v1621
    %1877 = vmatpush1.bf16.msra.mxu0 %v1620
    %1878 = vmatprep.subr.bf16.mxu0 %v1623
    %1879 = vmatpush1.bf16.msra.mxu0 %v1622
    %1880 = vmatprep.subr.bf16.mxu0 %v1625
    %1881 = vmatpush1.bf16.msra.mxu0 %v1624
    %1882 = vmatprep.subr.bf16.mxu0 %v1627
    %1883 = vmatpush1.bf16.msra.mxu0 %v1626
    %1884 = vmatprep.subr.bf16.mxu0 %v1629
    %1885 = vmatpush1.bf16.msra.mxu0 %v1628
    %1886 = vmatprep.subr.bf16.mxu0 %v1631
    %1887 = vmatpush1.bf16.msra.mxu0 %v1630
    %1888 = vmatprep.subr.bf16.mxu0 %v1633
    %1889 = vmatpush1.bf16.msra.mxu0 %v1632
    %1890 = vmatprep.subr.bf16.mxu0 %v1635
    %1891 = vmatpush1.bf16.msra.mxu0 %v1634
    %1892 = vmatprep.subr.bf16.mxu0 %v1637
    %1893 = vmatpush1.bf16.msra.mxu0 %v1636
    %1894 = vmatprep.subr.bf16.mxu0 %v1639
    %1895 = vmatpush1.bf16.msra.mxu0 %v1638
    %1896 = vmatprep.subr.bf16.mxu0 %v1641
    %1897 = vmatpush1.bf16.msra.mxu0 %v1640
    %1898 = vmatprep.subr.bf16.mxu0 %v1643
    %1899 = vmatpush1.bf16.msra.mxu0 %v1642
    %1900 = vmatprep.subr.bf16.mxu0 %v1645
    %1901 = vmatpush1.bf16.msra.mxu0 %v1644
    %1902 = vmatprep.subr.bf16.mxu0 %v1647
    %1903 = vmatpush1.bf16.msra.mxu0 %v1646
    %1904 = vmatprep.mubr.bf16.mxu0 %v1085
    %1905 = vmatmul.mubr.bf16.gmra.mrb[0].mxu0 %v1084
    %v1906 = vpop.f32.mrb[0].mxu0
    %v1907 = vadd.f32 %v1225, %v1906
    %v1908 = vpop.f32.mrb[0].mxu0
    %v1909 = vadd.f32 %v1229, %v1908
    %v1910 = vpop.f32.mrb[0].mxu0
    %v1911 = vadd.f32 %v1225, %v1910
    %v1912 = vpop.f32.mrb[0].mxu0
    %v1913 = vadd.f32 %v1229, %v1912
    %1914 = vdwg.mxu0
    %1915 = vmatprep.subr.bf16.mxu0 %v1649
    %1916 = vmatpush1.bf16.msra.mxu0 %v1648
    %1917 = vmatprep.subr.bf16.mxu0 %v1651
    %1918 = vmatpush1.bf16.msra.mxu0 %v1650
    %1919 = vmatprep.subr.bf16.mxu0 %v1653
    %1920 = vmatpush1.bf16.msra.mxu0 %v1652
    %1921 = vmatprep.subr.bf16.mxu0 %v1655
    %1922 = vmatpush1.bf16.msra.mxu0 %v1654
    %1923 = vmatprep.subr.bf16.mxu0 %v1657
    %1924 = vmatpush1.bf16.msra.mxu0 %v1656
    %1925 = vmatprep.subr.bf16.mxu0 %v1659
    %1926 = vmatpush1.bf16.msra.mxu0 %v1658
    %1927 = vmatprep.subr.bf16.mxu0 %v1661
    %1928 = vmatpush1.bf16.msra.mxu0 %v1660
    %1929 = vmatprep.subr.bf16.mxu0 %v1663
    %1930 = vmatpush1.bf16.msra.mxu0 %v1662
    %1931 = vmatprep.subr.bf16.mxu0 %v1665
    %1932 = vmatpush1.bf16.msra.mxu0 %v1664
    %1933 = vmatprep.subr.bf16.mxu0 %v1667
    %1934 = vmatpush1.bf16.msra.mxu0 %v1666
    %1935 = vmatprep.subr.bf16.mxu0 %v1669
    %1936 = vmatpush1.bf16.msra.mxu0 %v1668
    %1937 = vmatprep.subr.bf16.mxu0 %v1671
    %1938 = vmatpush1.bf16.msra.mxu0 %v1670
    %1939 = vmatprep.subr.bf16.mxu0 %v1673
    %1940 = vmatpush1.bf16.msra.mxu0 %v1672
    %1941 = vmatprep.subr.bf16.mxu0 %v1675
    %1942 = vmatpush1.bf16.msra.mxu0 %v1674
    %1943 = vmatprep.subr.bf16.mxu0 %v1677
    %1944 = vmatpush1.bf16.msra.mxu0 %v1676
    %1945 = vmatprep.subr.bf16.mxu0 %v1679
    %1946 = vmatpush1.bf16.msra.mxu0 %v1678
    %1947 = vmatprep.mubr.bf16.mxu0 %v1087
    %1948 = vmatmul.mubr.bf16.gmra.mrb[0].mxu0 %v1086
    %v1949 = vpop.f32.mrb[0].mxu0
    %v1950 = vadd.f32 %v1907, %v1949
    %v1951 = vpop.f32.mrb[0].mxu0
    %v1952 = vadd.f32 %v1909, %v1951
    %v1953 = vpop.f32.mrb[0].mxu0
    %v1954 = vadd.f32 %v1911, %v1953
    %v1955 = vpop.f32.mrb[0].mxu0
    %v1956 = vadd.f32 %v1913, %v1955
    %1957 = vdwg.mxu0
    %1958 = vmatprep.subr.bf16.mxu0 %v1681
    %1959 = vmatpush1.bf16.msra.mxu0 %v1680
    %1960 = vmatprep.subr.bf16.mxu0 %v1683
    %1961 = vmatpush1.bf16.msra.mxu0 %v1682
    %1962 = vmatprep.subr.bf16.mxu0 %v1685
    %1963 = vmatpush1.bf16.msra.mxu0 %v1684
    %1964 = vmatprep.subr.bf16.mxu0 %v1687
    %1965 = vmatpush1.bf16.msra.mxu0 %v1686
    %1966 = vmatprep.subr.bf16.mxu0 %v1689
    %1967 = vmatpush1.bf16.msra.mxu0 %v1688
    %1968 = vmatprep.subr.bf16.mxu0 %v1691
    %1969 = vmatpush1.bf16.msra.mxu0 %v1690
    %1970 = vmatprep.subr.bf16.mxu0 %v1693
    %1971 = vmatpush1.bf16.msra.mxu0 %v1692
    %1972 = vmatprep.subr.bf16.mxu0 %v1695
    %1973 = vmatpush1.bf16.msra.mxu0 %v1694
    %1974 = vmatprep.subr.bf16.mxu0 %v1697
    %1975 = vmatpush1.bf16.msra.mxu0 %v1696
    %1976 = vmatprep.subr.bf16.mxu0 %v1699
    %1977 = vmatpush1.bf16.msra.mxu0 %v1698
    %1978 = vmatprep.subr.bf16.mxu0 %v1701
    %1979 = vmatpush1.bf16.msra.mxu0 %v1700
    %1980 = vmatprep.subr.bf16.mxu0 %v1703
    %1981 = vmatpush1.bf16.msra.mxu0 %v1702
    %1982 = vmatprep.subr.bf16.mxu0 %v1705
    %1983 = vmatpush1.bf16.msra.mxu0 %v1704
    %1984 = vmatprep.subr.bf16.mxu0 %v1707
    %1985 = vmatpush1.bf16.msra.mxu0 %v1706
    %1986 = vmatprep.subr.bf16.mxu0 %v1709
    %1987 = vmatpush1.bf16.msra.mxu0 %v1708
    %1988 = vmatprep.subr.bf16.mxu0 %v1711
    %1989 = vmatpush1.bf16.msra.mxu0 %v1710
    %1990 = vmatprep.mubr.bf16.mxu0 %v1089
    %1991 = vmatmul.mubr.bf16.gmra.mrb[0].mxu0 %v1088
    %v1992 = vpop.f32.mrb[0].mxu0
    %v1993 = vadd.f32 %v1950, %v1992
    %v1994 = vpop.f32.mrb[0].mxu0
    %v1995 = vadd.f32 %v1952, %v1994
    %v1996 = vpop.f32.mrb[0].mxu0
    %v1997 = vadd.f32 %v1954, %v1996
    %v1998 = vpop.f32.mrb[0].mxu0
    %v1999 = vadd.f32 %v1956, %v1998
    %2000 = vdwg.mxu0
    %2001 = vmatprep.subr.bf16.mxu0 %v1713
    %2002 = vmatpush1.bf16.msra.mxu0 %v1712
    %2003 = vmatprep.subr.bf16.mxu0 %v1715
    %2004 = vmatpush1.bf16.msra.mxu0 %v1714
    %2005 = vmatprep.subr.bf16.mxu0 %v1717
    %2006 = vmatpush1.bf16.msra.mxu0 %v1716
    %2007 = vmatprep.subr.bf16.mxu0 %v1719
    %2008 = vmatpush1.bf16.msra.mxu0 %v1718
    %2009 = vmatprep.subr.bf16.mxu0 %v1721
    %2010 = vmatpush1.bf16.msra.mxu0 %v1720
    %2011 = vmatprep.subr.bf16.mxu0 %v1723
    %2012 = vmatpush1.bf16.msra.mxu0 %v1722
    %2013 = vmatprep.subr.bf16.mxu0 %v1725
    %2014 = vmatpush1.bf16.msra.mxu0 %v1724
    %2015 = vmatprep.subr.bf16.mxu0 %v1727
    %2016 = vmatpush1.bf16.msra.mxu0 %v1726
    %2017 = vmatprep.subr.bf16.mxu0 %v1729
    %2018 = vmatpush1.bf16.msra.mxu0 %v1728
    %2019 = vmatprep.subr.bf16.mxu0 %v1731
    %2020 = vmatpush1.bf16.msra.mxu0 %v1730
    %2021 = vmatprep.subr.bf16.mxu0 %v1733
    %2022 = vmatpush1.bf16.msra.mxu0 %v1732
    %2023 = vmatprep.subr.bf16.mxu0 %v1735
    %2024 = vmatpush1.bf16.msra.mxu0 %v1734
    %2025 = vmatprep.subr.bf16.mxu0 %v1737
    %2026 = vmatpush1.bf16.msra.mxu0 %v1736
    %2027 = vmatprep.subr.bf16.mxu0 %v1739
    %2028 = vmatpush1.bf16.msra.mxu0 %v1738
    %2029 = vmatprep.subr.bf16.mxu0 %v1741
    %2030 = vmatpush1.bf16.msra.mxu0 %v1740
    %2031 = vmatprep.subr.bf16.mxu0 %v1743
    %2032 = vmatpush1.bf16.msra.mxu0 %v1742
    %2033 = vmatprep.mubr.bf16.mxu0 %v1091
    %2034 = vmatmul.mubr.bf16.gmra.mrb[0].mxu0 %v1090
    %v2035 = vpop.f32.mrb[0].mxu0
    %v2036 = vadd.f32 %v1993, %v2035
    %v2037 = vpop.f32.mrb[0].mxu0
    %v2038 = vadd.f32 %v1995, %v2037
    %v2039 = vpop.f32.mrb[0].mxu0
    %v2040 = vadd.f32 %v1997, %v2039
    %v2041 = vpop.f32.mrb[0].mxu0
    %v2042 = vadd.f32 %v1999, %v2041
    %2043 = vdwg.mxu0
    %2044 = vst [vmem:[#allocation10] sm:$0xff] %v2036
    %2045 = vst [vmem:[#allocation10 + $0x8] sm:$0xff] %v2038
    %2046 = vst [vmem:[#allocation10 + $0x10] sm:$0xff] %v2040
    %2047 = vst [vmem:[#allocation10 + $0x18] sm:$0xff] %v2042
    // Predicated region
    $region38: #{tpu_custom_call.1} parent=1 // pred_check
      _
    $region39: #{tpu_custom_call.1} parent=1 // pred_check_branch
      %2049 = sbr.rel (0) target = $region41
    $region40: #{tpu_custom_call.1} parent=1 // pred_region
      %s2051 = ssub.s32 512, 512
      %2052 = vsyncadd [#allocation4], %s2051
      %s2053 = sshll.u32 [#allocation10], 4
      %s2054 = int_to_ptr.vmem [resolvable:$true] %s2053
      %2059 = dma.vmem_to_hbm [thread:$0]  %s2054, 512, %s5, [#allocation4], 256, 256, 16
    $region41: #{tpu_custom_call.1} parent=1 // pred_fallthru
      _
    // Predicated region
    $region42: #{tpu_custom_call.1} parent=1 // pred_check
      _
    $region43: #{tpu_custom_call.1} parent=1 // pred_check_branch
      %2061 = sbr.rel (0) target = $region45
    $region44: #{tpu_custom_call.1} parent=1 // pred_region
      %2062 = dma.done [#allocation4], 512
    $region45: #{tpu_custom_call.1} parent=1 // pred_fallthru
      _
    %2063 = vsyncpa [#allocation3], 1
    %2064 = vsyncpa [#allocation6], 1
    %2065 = vsyncpa [#allocation9], 1
    %2066 = vsyncpa [#allocation4], 1

</llo_original>
